<compile_context>
chip_gen: v6e
topology: v6e:2x2x1
jax: 0.10.0
libtpu: 0.0.40
codegen_flags: <defaults>
</compile_context>

<pallas_src>
import jax
import jax.numpy as jnp
from jax import lax
from jax.experimental import pallas as pl
from jax.experimental.pallas import tpu as pltpu

# ----------------------------- config ---------------------------------------
N_HEAD = 2
D_MODEL = 32
D_K = 16
D_V = 16
LN_EPS = 1e-6
MASK_FILL = -1000000000.0
INV_TEMP = 1.0 / (D_K ** 0.5)


# ----------------------------- kernel ---------------------------------------
def mha_kernel(q_ref, k_ref, v_ref, mask_ref,
               wq_ref, wk_ref, wv_ref, wfc_ref,
               gamma_ref, beta_ref,
               out_ref, attn_ref):
    xq = q_ref[0]          # (Lq, D_MODEL)
    xk = k_ref[0]          # (Lk, D_MODEL)
    xv = v_ref[0]          # (Lv, D_MODEL)

    residual = xq
    Lk = mask_ref.shape[2]

    # Hoisted mask comparison: computed once, reused for every head.
    # (Exact masked_fill semantics are preserved by keeping the select.)
    mask_zero = mask_ref[0] == 0.0                                     # (Lq, Lk)

    # Fused full-width projections: one MXU push per projection instead of
    # N_HEAD weight-sliced minis.  1/temperature folded into Q once.
    q_all = jnp.dot(xq, wq_ref[...],
                    preferred_element_type=jnp.float32) * jnp.float32(INV_TEMP)
    k_all = jnp.dot(xk, wk_ref[...], preferred_element_type=jnp.float32)
    v_all = jnp.dot(xv, wv_ref[...], preferred_element_type=jnp.float32)

    proj = jnp.zeros((xq.shape[0], D_MODEL), dtype=jnp.float32)
    for h in range(N_HEAD):
        qh = q_all[:, h * D_K:(h + 1) * D_K]          # (Lq, D_K)
        kh = k_all[:, h * D_K:(h + 1) * D_K]          # (Lk, D_K)
        vh = v_all[:, h * D_V:(h + 1) * D_V]          # (Lv, D_V)

        # scores = qh @ kh.T without materializing the transpose.
        scores = lax.dot_general(qh, kh, (((1,), (1,)), ((), ())),
                                 preferred_element_type=jnp.float32)  # (Lq, Lk)
        scores = jnp.where(mask_zero, jnp.float32(MASK_FILL), scores)

        # numerically stable softmax over keys (same result as F.softmax)
        scores = scores - jnp.max(scores, axis=-1, keepdims=True)
        exp_s = jnp.exp(scores)
        attn_h = exp_s / jnp.sum(exp_s, axis=-1, keepdims=True)        # (Lq, Lk)

        # lane-denser attn slab: both heads land in one contiguous writeback.
        attn_ref[0, :, h * Lk:(h + 1) * Lk] = attn_h

        # sum-over-heads output projection (no lane concat of head outputs)
        oh = jnp.dot(attn_h, vh, preferred_element_type=jnp.float32)   # (Lq, D_V)
        proj = proj + jnp.dot(oh, wfc_ref[h * D_V:(h + 1) * D_V, :],
                              preferred_element_type=jnp.float32)      # (Lq, D_MODEL)

    # NOTE: self.dropout(...) is identity in eval mode.
    y = proj + residual

    # LayerNorm over last dim, eps=1e-6
    mean = jnp.mean(y, axis=-1, keepdims=True)
    var = jnp.mean((y - mean) ** 2, axis=-1, keepdims=True)
    y_norm = (y - mean) * lax.rsqrt(var + jnp.float32(LN_EPS))
    out_ref[0] = y_norm * gamma_ref[...] + beta_ref[...]


# ----------------------------- wrapper ---------------------------------------
@jax.jit
def multi_head_attention(q, k, v, mask, wq, wk, wv, wfc, gamma, beta):
    """q,k,v: (B, L, D_MODEL); mask: (B, Lq, Lk) float32 (1 keep / 0 mask).
    wq/wk/wv: (D_MODEL, N_HEAD*D_K or D_V); wfc: (N_HEAD*D_V, D_MODEL).
    gamma/beta: (1, D_MODEL). Returns (out (B,Lq,D_MODEL), attn (B,H,Lq,Lk))."""
    B, Lq, _ = q.shape
    Lk = k.shape[1]
    Lv = v.shape[1]

    out_shape = (
        jax.ShapeDtypeStruct((B, Lq, D_MODEL), jnp.float32),
        jax.ShapeDtypeStruct((B, Lq, N_HEAD * Lk), jnp.float32),   # attn slab
    )

    grid_spec = pltpu.PrefetchScalarGridSpec(
        num_scalar_prefetch=0,
        grid=(B,),
        in_specs=[
            pl.BlockSpec((1, Lq, D_MODEL), lambda b: (b, 0, 0)),          # q
            pl.BlockSpec((1, Lk, D_MODEL), lambda b: (b, 0, 0)),          # k
            pl.BlockSpec((1, Lv, D_MODEL), lambda b: (b, 0, 0)),          # v
            pl.BlockSpec((1, Lq, Lk), lambda b: (b, 0, 0)),               # mask
            pl.BlockSpec((D_MODEL, N_HEAD * D_K), lambda b: (0, 0)),      # wq
            pl.BlockSpec((D_MODEL, N_HEAD * D_K), lambda b: (0, 0)),      # wk
            pl.BlockSpec((D_MODEL, N_HEAD * D_V), lambda b: (0, 0)),      # wv
            pl.BlockSpec((N_HEAD * D_V, D_MODEL), lambda b: (0, 0)),      # wfc
            pl.BlockSpec((1, D_MODEL), lambda b: (0, 0)),                 # gamma
            pl.BlockSpec((1, D_MODEL), lambda b: (0, 0)),                 # beta
        ],
        out_specs=[
            pl.BlockSpec((1, Lq, D_MODEL), lambda b: (b, 0, 0)),          # out
            pl.BlockSpec((1, Lq, N_HEAD * Lk), lambda b: (b, 0, 0)),      # attn slab
        ],
    )

    out, attn_slab = pl.pallas_call(
        mha_kernel,
        out_shape=out_shape,
        grid_spec=grid_spec,
        compiler_params=pltpu.CompilerParams(
            dimension_semantics=("parallel",)),
    )(q, k, v, mask, wq, wk, wv, wfc, gamma, beta)

    # layout plumbing only: (B, Lq, H*Lk) -> (B, H, Lq, Lk) to match the module.
    attn = attn_slab.reshape(B, Lq, N_HEAD, Lk).transpose(0, 2, 1, 3)
    return out, attn


# ----------------------------- main ------------------------------------------
if __name__ == "__main__":
    B, L = 2, 8

    key = jax.random.PRNGKey(0)
    kq, kk, kv, kwq, kwk, kwv, kwfc = jax.random.split(key, 7)

    # inputs: (batch, seq, d_model)
    q = jax.random.normal(kq, (B, L, D_MODEL), dtype=jnp.float32)
    k = jax.random.normal(kk, (B, L, D_MODEL), dtype=jnp.float32)
    v = jax.random.normal(kv, (B, L, D_MODEL), dtype=jnp.float32)

    # mask: 1 = attend, 0 = masked (a few positions masked deterministically)
    mask = jnp.ones((B, L, L), dtype=jnp.float32)
    mask = mask.at[:, :, -2:].set(0.0)

    # deterministic parameter init (nn.Linear-style uniform), stored as
    # (in_features, out_features) i.e. the transpose of torch's weight.
    def linear_init(rng, fan_in, fan_out):
        bound = 1.0 / (fan_in ** 0.5)
        return jax.random.uniform(rng, (fan_in, fan_out),
                                  minval=-bound, maxval=bound,
                                  dtype=jnp.float32)

    wq = linear_init(kwq, D_MODEL, N_HEAD * D_K)
    wk = linear_init(kwk, D_MODEL, N_HEAD * D_K)
    wv = linear_init(kwv, D_MODEL, N_HEAD * D_V)
    wfc = linear_init(kwfc, N_HEAD * D_V, D_MODEL)
    gamma = jnp.ones((1, D_MODEL), dtype=jnp.float32)   # LayerNorm weight
    beta = jnp.zeros((1, D_MODEL), dtype=jnp.float32)   # LayerNorm bias

    out, attn = multi_head_attention(q, k, v, mask, wq, wk, wv, wfc, gamma, beta)
    jax.block_until_ready((out, attn))

    # sanity: shapes, finite values, softmax rows sum to 1, masked keys ~0
    assert out.shape == (B, L, D_MODEL)
    assert attn.shape == (B, N_HEAD, L, L)
    assert bool(jnp.all(jnp.isfinite(out)))
    assert bool(jnp.all(jnp.isfinite(attn)))
    assert bool(jnp.allclose(jnp.sum(attn, axis=-1), 1.0, atol=1e-5))
    assert bool(jnp.all(attn[:, :, :, -2:] < 1e-6))

    print("KERNEL_OK")
</pallas_src>

<mosaic_0001>
module attributes {stable_mosaic.version = 11 : i64} {
  func.func @mha_kernel(%arg0: i32, %arg1: memref<1x8x32xf32, #tpu.memory_space<vmem>>, %arg2: memref<1x8x32xf32, #tpu.memory_space<vmem>>, %arg3: memref<1x8x32xf32, #tpu.memory_space<vmem>>, %arg4: memref<1x8x8xf32, #tpu.memory_space<vmem>>, %arg5: memref<32x32xf32, #tpu.memory_space<vmem>>, %arg6: memref<32x32xf32, #tpu.memory_space<vmem>>, %arg7: memref<32x32xf32, #tpu.memory_space<vmem>>, %arg8: memref<32x32xf32, #tpu.memory_space<vmem>>, %arg9: memref<1x32xf32, #tpu.memory_space<vmem>>, %arg10: memref<1x32xf32, #tpu.memory_space<vmem>>, %arg11: memref<1x8x32xf32, #tpu.memory_space<vmem>>, %arg12: memref<1x8x16xf32, #tpu.memory_space<vmem>>) attributes {dimension_semantics = [#tpu.dimension_semantics<parallel>], iteration_bounds = array<i64: 2>, scalar_prefetch = 0 : i64, scratch_operands = 0 : i64, tpu.core_type = #tpu.core_type<tc>, window_params = [{transform_indices = @transform_0, window_bounds = array<i64: 1, 8, 32>}, {transform_indices = @transform_1, window_bounds = array<i64: 1, 8, 32>}, {transform_indices = @transform_2, window_bounds = array<i64: 1, 8, 32>}, {transform_indices = @transform_3, window_bounds = array<i64: 1, 8, 8>}, {pipeline_mode = #tpu.pipeline_mode<synchronous>, transform_indices = @transform_4, window_bounds = array<i64: 32, 32>}, {pipeline_mode = #tpu.pipeline_mode<synchronous>, transform_indices = @transform_5, window_bounds = array<i64: 32, 32>}, {pipeline_mode = #tpu.pipeline_mode<synchronous>, transform_indices = @transform_6, window_bounds = array<i64: 32, 32>}, {pipeline_mode = #tpu.pipeline_mode<synchronous>, transform_indices = @transform_7, window_bounds = array<i64: 32, 32>}, {pipeline_mode = #tpu.pipeline_mode<synchronous>, transform_indices = @transform_8, window_bounds = array<i64: 1, 32>}, {pipeline_mode = #tpu.pipeline_mode<synchronous>, transform_indices = @transform_9, window_bounds = array<i64: 1, 32>}, {transform_indices = @transform_10, window_bounds = array<i64: 1, 8, 32>}, {transform_indices = @transform_11, window_bounds = array<i64: 1, 8, 16>}]} {
    %c0 = arith.constant 0 : index
    %c0_0 = arith.constant 0 : index
    %c0_1 = arith.constant 0 : index
    %0 = vector.load %arg1[%c0, %c0_0, %c0_1] : memref<1x8x32xf32, #tpu.memory_space<vmem>>, vector<1x8x32xf32>
    %1 = vector.shape_cast %0 : vector<1x8x32xf32> to vector<8x32xf32>
    %c0_2 = arith.constant 0 : index
    %c0_3 = arith.constant 0 : index
    %c0_4 = arith.constant 0 : index
    %2 = vector.load %arg2[%c0_2, %c0_3, %c0_4] : memref<1x8x32xf32, #tpu.memory_space<vmem>>, vector<1x8x32xf32>
    %3 = vector.shape_cast %2 : vector<1x8x32xf32> to vector<8x32xf32>
    %c0_5 = arith.constant 0 : index
    %c0_6 = arith.constant 0 : index
    %c0_7 = arith.constant 0 : index
    %4 = vector.load %arg3[%c0_5, %c0_6, %c0_7] : memref<1x8x32xf32, #tpu.memory_space<vmem>>, vector<1x8x32xf32>
    %5 = vector.shape_cast %4 : vector<1x8x32xf32> to vector<8x32xf32>
    %c0_8 = arith.constant 0 : index
    %c0_9 = arith.constant 0 : index
    %c0_10 = arith.constant 0 : index
    %6 = vector.load %arg4[%c0_8, %c0_9, %c0_10] : memref<1x8x8xf32, #tpu.memory_space<vmem>>, vector<1x8x8xf32>
    %7 = vector.shape_cast %6 : vector<1x8x8xf32> to vector<8x8xf32>
    %cst = arith.constant 0.000000e+00 : f32
    %8 = vector.broadcast %cst : f32 to vector<8x8xf32>
    %9 = arith.cmpf oeq, %7, %8 : vector<8x8xf32>
    %c0_11 = arith.constant 0 : index
    %c0_12 = arith.constant 0 : index
    %10 = vector.load %arg5[%c0_11, %c0_12] : memref<32x32xf32, #tpu.memory_space<vmem>>, vector<32x32xf32>
    %cst_13 = arith.constant dense<0.000000e+00> : vector<8x32xf32>
    %11 = tpu.matmul %1, %10, %cst_13 {dimension_numbers = #tpu.dot_dimension_numbers<[1], [0], [0], [1], [0, 0, 1, 1], [], []>} : vector<8x32xf32>, vector<32x32xf32>, vector<8x32xf32> -> vector<8x32xf32>
    %cst_14 = arith.constant 2.500000e-01 : f32
    %12 = vector.broadcast %cst_14 : f32 to vector<8x32xf32>
    %13 = arith.mulf %11, %12 : vector<8x32xf32>
    %c0_15 = arith.constant 0 : index
    %c0_16 = arith.constant 0 : index
    %14 = vector.load %arg6[%c0_15, %c0_16] : memref<32x32xf32, #tpu.memory_space<vmem>>, vector<32x32xf32>
    %cst_17 = arith.constant dense<0.000000e+00> : vector<8x32xf32>
    %15 = tpu.matmul %3, %14, %cst_17 {dimension_numbers = #tpu.dot_dimension_numbers<[1], [0], [0], [1], [0, 0, 1, 1], [], []>} : vector<8x32xf32>, vector<32x32xf32>, vector<8x32xf32> -> vector<8x32xf32>
    %c0_18 = arith.constant 0 : index
    %c0_19 = arith.constant 0 : index
    %16 = vector.load %arg7[%c0_18, %c0_19] : memref<32x32xf32, #tpu.memory_space<vmem>>, vector<32x32xf32>
    %cst_20 = arith.constant dense<0.000000e+00> : vector<8x32xf32>
    %17 = tpu.matmul %5, %16, %cst_20 {dimension_numbers = #tpu.dot_dimension_numbers<[1], [0], [0], [1], [0, 0, 1, 1], [], []>} : vector<8x32xf32>, vector<32x32xf32>, vector<8x32xf32> -> vector<8x32xf32>
    %cst_21 = arith.constant 0.000000e+00 : f32
    %18 = vector.broadcast %cst_21 : f32 to vector<8x32xf32>
    %19 = vector.extract_strided_slice %13 {offsets = [0, 0], sizes = [8, 16], strides = [1, 1]} : vector<8x32xf32> to vector<8x16xf32>
    %20 = vector.extract_strided_slice %15 {offsets = [0, 0], sizes = [8, 16], strides = [1, 1]} : vector<8x32xf32> to vector<8x16xf32>
    %21 = vector.extract_strided_slice %17 {offsets = [0, 0], sizes = [8, 16], strides = [1, 1]} : vector<8x32xf32> to vector<8x16xf32>
    %cst_22 = arith.constant dense<0.000000e+00> : vector<8x8xf32>
    %22 = tpu.matmul %19, %20, %cst_22 {dimension_numbers = #tpu.dot_dimension_numbers<[1], [1], [0], [0], [0, 0, 1, 0], [], []>} : vector<8x16xf32>, vector<8x16xf32>, vector<8x8xf32> -> vector<8x8xf32>
    %cst_23 = arith.constant -1.000000e+09 : f32
    %23 = vector.broadcast %cst_23 : f32 to vector<8x8xf32>
    %24 = arith.select %9, %23, %22 : vector<8x8xi1>, vector<8x8xf32>
    %cst_24 = arith.constant dense<0xFF800000> : vector<8xf32>
    %25 = vector.multi_reduction <maximumf>, %24, %cst_24 [1] : vector<8x8xf32> to vector<8xf32>
    %26 = vector.shape_cast %25 : vector<8xf32> to vector<8x1xf32>
    %27 = vector.broadcast %26 : vector<8x1xf32> to vector<8x8xf32>
    %28 = arith.subf %24, %27 : vector<8x8xf32>
    %29 = math.exp %28 : vector<8x8xf32>
    %cst_25 = arith.constant dense<0.000000e+00> : vector<8xf32>
    %30 = vector.multi_reduction <add>, %29, %cst_25 [1] : vector<8x8xf32> to vector<8xf32>
    %31 = vector.shape_cast %30 : vector<8xf32> to vector<8x1xf32>
    %32 = vector.broadcast %31 : vector<8x1xf32> to vector<8x8xf32>
    %33 = arith.divf %29, %32 : vector<8x8xf32>
    %c0_26 = arith.constant 0 : index
    %c0_27 = arith.constant 0 : index
    %c0_28 = arith.constant 0 : index
    %34 = vector.load %arg12[%c0_26, %c0_27, %c0_28] : memref<1x8x16xf32, #tpu.memory_space<vmem>>, vector<1x8x8xf32>
    %35 = vector.shape_cast %34 : vector<1x8x8xf32> to vector<8x8xf32>
    %36 = vector.shape_cast %33 : vector<8x8xf32> to vector<1x8x8xf32>
    tpu.vector_store %arg12[%c0_26, %c0_27, %c0_28], %36 {strides = array<i32>} : memref<1x8x16xf32, #tpu.memory_space<vmem>>, vector<1x8x8xf32>,
    %cst_29 = arith.constant dense<0.000000e+00> : vector<8x16xf32>
    %37 = tpu.matmul %33, %21, %cst_29 {dimension_numbers = #tpu.dot_dimension_numbers<[1], [0], [0], [1], [0, 0, 1, 1], [], []>} : vector<8x8xf32>, vector<8x16xf32>, vector<8x16xf32> -> vector<8x16xf32>
    %c0_30 = arith.constant 0 : index
    %c0_31 = arith.constant 0 : index
    %38 = vector.load %arg8[%c0_30, %c0_31] : memref<32x32xf32, #tpu.memory_space<vmem>>, vector<16x32xf32>
    %cst_32 = arith.constant dense<0.000000e+00> : vector<8x32xf32>
    %39 = tpu.matmul %37, %38, %cst_32 {dimension_numbers = #tpu.dot_dimension_numbers<[1], [0], [0], [1], [0, 0, 1, 1], [], []>} : vector<8x16xf32>, vector<16x32xf32>, vector<8x32xf32> -> vector<8x32xf32>
    %40 = arith.addf %18, %39 : vector<8x32xf32>
    %41 = vector.extract_strided_slice %13 {offsets = [0, 16], sizes = [8, 16], strides = [1, 1]} : vector<8x32xf32> to vector<8x16xf32>
    %42 = vector.extract_strided_slice %15 {offsets = [0, 16], sizes = [8, 16], strides = [1, 1]} : vector<8x32xf32> to vector<8x16xf32>
    %43 = vector.extract_strided_slice %17 {offsets = [0, 16], sizes = [8, 16], strides = [1, 1]} : vector<8x32xf32> to vector<8x16xf32>
    %cst_33 = arith.constant dense<0.000000e+00> : vector<8x8xf32>
    %44 = tpu.matmul %41, %42, %cst_33 {dimension_numbers = #tpu.dot_dimension_numbers<[1], [1], [0], [0], [0, 0, 1, 0], [], []>} : vector<8x16xf32>, vector<8x16xf32>, vector<8x8xf32> -> vector<8x8xf32>
    %cst_34 = arith.constant -1.000000e+09 : f32
    %45 = vector.broadcast %cst_34 : f32 to vector<8x8xf32>
    %46 = arith.select %9, %45, %44 : vector<8x8xi1>, vector<8x8xf32>
    %cst_35 = arith.constant dense<0xFF800000> : vector<8xf32>
    %47 = vector.multi_reduction <maximumf>, %46, %cst_35 [1] : vector<8x8xf32> to vector<8xf32>
    %48 = vector.shape_cast %47 : vector<8xf32> to vector<8x1xf32>
    %49 = vector.broadcast %48 : vector<8x1xf32> to vector<8x8xf32>
    %50 = arith.subf %46, %49 : vector<8x8xf32>
    %51 = math.exp %50 : vector<8x8xf32>
    %cst_36 = arith.constant dense<0.000000e+00> : vector<8xf32>
    %52 = vector.multi_reduction <add>, %51, %cst_36 [1] : vector<8x8xf32> to vector<8xf32>
    %53 = vector.shape_cast %52 : vector<8xf32> to vector<8x1xf32>
    %54 = vector.broadcast %53 : vector<8x1xf32> to vector<8x8xf32>
    %55 = arith.divf %51, %54 : vector<8x8xf32>
    %c0_37 = arith.constant 0 : index
    %c0_38 = arith.constant 0 : index
    %c8 = arith.constant 8 : index
    %56 = vector.load %arg12[%c0_37, %c0_38, %c8] : memref<1x8x16xf32, #tpu.memory_space<vmem>>, vector<1x8x8xf32>
    %57 = vector.shape_cast %56 : vector<1x8x8xf32> to vector<8x8xf32>
    %58 = vector.shape_cast %55 : vector<8x8xf32> to vector<1x8x8xf32>
    tpu.vector_store %arg12[%c0_37, %c0_38, %c8], %58 {strides = array<i32>} : memref<1x8x16xf32, #tpu.memory_space<vmem>>, vector<1x8x8xf32>,
    %cst_39 = arith.constant dense<0.000000e+00> : vector<8x16xf32>
    %59 = tpu.matmul %55, %43, %cst_39 {dimension_numbers = #tpu.dot_dimension_numbers<[1], [0], [0], [1], [0, 0, 1, 1], [], []>} : vector<8x8xf32>, vector<8x16xf32>, vector<8x16xf32> -> vector<8x16xf32>
    %c16 = arith.constant 16 : index
    %c0_40 = arith.constant 0 : index
    %60 = vector.load %arg8[%c16, %c0_40] : memref<32x32xf32, #tpu.memory_space<vmem>>, vector<16x32xf32>
    %cst_41 = arith.constant dense<0.000000e+00> : vector<8x32xf32>
    %61 = tpu.matmul %59, %60, %cst_41 {dimension_numbers = #tpu.dot_dimension_numbers<[1], [0], [0], [1], [0, 0, 1, 1], [], []>} : vector<8x16xf32>, vector<16x32xf32>, vector<8x32xf32> -> vector<8x32xf32>
    %62 = arith.addf %40, %61 : vector<8x32xf32>
    %63 = arith.addf %62, %1 : vector<8x32xf32>
    %cst_42 = arith.constant dense<0.000000e+00> : vector<8xf32>
    %64 = vector.multi_reduction <add>, %63, %cst_42 [1] : vector<8x32xf32> to vector<8xf32>
    %65 = vector.shape_cast %64 : vector<8xf32> to vector<8x1xf32>
    %cst_43 = arith.constant 3.200000e+01 : f32
    %66 = vector.broadcast %cst_43 : f32 to vector<8x1xf32>
    %67 = arith.divf %65, %66 : vector<8x1xf32>
    %68 = vector.broadcast %67 : vector<8x1xf32> to vector<8x32xf32>
    %69 = arith.subf %63, %68 : vector<8x32xf32>
    %70 = arith.mulf %69, %69 : vector<8x32xf32>
    %cst_44 = arith.constant dense<0.000000e+00> : vector<8xf32>
    %71 = vector.multi_reduction <add>, %70, %cst_44 [1] : vector<8x32xf32> to vector<8xf32>
    %72 = vector.shape_cast %71 : vector<8xf32> to vector<8x1xf32>
    %cst_45 = arith.constant 3.200000e+01 : f32
    %73 = vector.broadcast %cst_45 : f32 to vector<8x1xf32>
    %74 = arith.divf %72, %73 : vector<8x1xf32>
    %75 = vector.broadcast %67 : vector<8x1xf32> to vector<8x32xf32>
    %76 = arith.subf %63, %75 : vector<8x32xf32>
    %cst_46 = arith.constant 9.99999997E-7 : f32
    %77 = vector.broadcast %cst_46 : f32 to vector<8x1xf32>
    %78 = arith.addf %74, %77 : vector<8x1xf32>
    %79 = math.rsqrt %78 : vector<8x1xf32>
    %80 = vector.broadcast %79 : vector<8x1xf32> to vector<8x32xf32>
    %81 = arith.mulf %76, %80 : vector<8x32xf32>
    %c0_47 = arith.constant 0 : index
    %c0_48 = arith.constant 0 : index
    %82 = vector.load %arg9[%c0_47, %c0_48] : memref<1x32xf32, #tpu.memory_space<vmem>>, vector<1x32xf32>
    %83 = vector.broadcast %82 : vector<1x32xf32> to vector<8x32xf32>
    %84 = arith.mulf %81, %83 : vector<8x32xf32>
    %c0_49 = arith.constant 0 : index
    %c0_50 = arith.constant 0 : index
    %85 = vector.load %arg10[%c0_49, %c0_50] : memref<1x32xf32, #tpu.memory_space<vmem>>, vector<1x32xf32>
    %86 = vector.broadcast %85 : vector<1x32xf32> to vector<8x32xf32>
    %87 = arith.addf %84, %86 : vector<8x32xf32>
    %c0_51 = arith.constant 0 : index
    %c0_52 = arith.constant 0 : index
    %c0_53 = arith.constant 0 : index
    %88 = vector.load %arg11[%c0_51, %c0_52, %c0_53] : memref<1x8x32xf32, #tpu.memory_space<vmem>>, vector<1x8x32xf32>
    %89 = vector.shape_cast %88 : vector<1x8x32xf32> to vector<8x32xf32>
    %90 = vector.shape_cast %87 : vector<8x32xf32> to vector<1x8x32xf32>
    tpu.vector_store %arg11[%c0_51, %c0_52, %c0_53], %90 {strides = array<i32>} : memref<1x8x32xf32, #tpu.memory_space<vmem>>, vector<1x8x32xf32>,
    return
  }
  func.func @transform_0(%arg0: i32) -> (i32, i32, i32) {
    %c0_i32 = arith.constant 0 : i32
    %c0_i32_0 = arith.constant 0 : i32
    %c0_i32_1 = arith.constant 0 : i32
    return %arg0, %c0_i32, %c0_i32_0 : i32, i32, i32
  }
  func.func @transform_1(%arg0: i32) -> (i32, i32, i32) {
    %c0_i32 = arith.constant 0 : i32
    %c0_i32_0 = arith.constant 0 : i32
    %c0_i32_1 = arith.constant 0 : i32
    return %arg0, %c0_i32, %c0_i32_0 : i32, i32, i32
  }
  func.func @transform_2(%arg0: i32) -> (i32, i32, i32) {
    %c0_i32 = arith.constant 0 : i32
    %c0_i32_0 = arith.constant 0 : i32
    %c0_i32_1 = arith.constant 0 : i32
    return %arg0, %c0_i32, %c0_i32_0 : i32, i32, i32
  }
  func.func @transform_3(%arg0: i32) -> (i32, i32, i32) {
    %c0_i32 = arith.constant 0 : i32
    %c0_i32_0 = arith.constant 0 : i32
    %c0_i32_1 = arith.constant 0 : i32
    return %arg0, %c0_i32, %c0_i32_0 : i32, i32, i32
  }
  func.func @transform_4(%arg0: i32) -> (i32, i32) {
    %c0_i32 = arith.constant 0 : i32
    %c0_i32_0 = arith.constant 0 : i32
    %c0_i32_1 = arith.constant 0 : i32
    return %c0_i32, %c0_i32_0 : i32, i32
  }
  func.func @transform_5(%arg0: i32) -> (i32, i32) {
    %c0_i32 = arith.constant 0 : i32
    %c0_i32_0 = arith.constant 0 : i32
    %c0_i32_1 = arith.constant 0 : i32
    return %c0_i32, %c0_i32_0 : i32, i32
  }
  func.func @transform_6(%arg0: i32) -> (i32, i32) {
    %c0_i32 = arith.constant 0 : i32
    %c0_i32_0 = arith.constant 0 : i32
    %c0_i32_1 = arith.constant 0 : i32
    return %c0_i32, %c0_i32_0 : i32, i32
  }
  func.func @transform_7(%arg0: i32) -> (i32, i32) {
    %c0_i32 = arith.constant 0 : i32
    %c0_i32_0 = arith.constant 0 : i32
    %c0_i32_1 = arith.constant 0 : i32
    return %c0_i32, %c0_i32_0 : i32, i32
  }
  func.func @transform_8(%arg0: i32) -> (i32, i32) {
    %c0_i32 = arith.constant 0 : i32
    %c0_i32_0 = arith.constant 0 : i32
    %c0_i32_1 = arith.constant 0 : i32
    return %c0_i32, %c0_i32_0 : i32, i32
  }
  func.func @transform_9(%arg0: i32) -> (i32, i32) {
    %c0_i32 = arith.constant 0 : i32
    %c0_i32_0 = arith.constant 0 : i32
    %c0_i32_1 = arith.constant 0 : i32
    return %c0_i32, %c0_i32_0 : i32, i32
  }
  func.func @transform_10(%arg0: i32) -> (i32, i32, i32) {
    %c0_i32 = arith.constant 0 : i32
    %c0_i32_0 = arith.constant 0 : i32
    %c0_i32_1 = arith.constant 0 : i32
    return %arg0, %c0_i32, %c0_i32_0 : i32, i32, i32
  }
  func.func @transform_11(%arg0: i32) -> (i32, i32, i32) {
    %c0_i32 = arith.constant 0 : i32
    %c0_i32_0 = arith.constant 0 : i32
    %c0_i32_1 = arith.constant 0 : i32
    return %arg0, %c0_i32, %c0_i32_0 : i32, i32, i32
  }
}

</mosaic_0001>

<llo_original>
// kernel: multi_head_attention.1
$region0: #{multi_head_attention.1}
  #allocation0 [shape = 'u32[]', space=smem, size = 0x4, offset = 0x4, fixed_abs, tag = 'smem constant byte address 0x4 - core index']
  #allocation1 [shape = 'u32[144,128]{1,0:T(1,128)}', space=vmem, size = 0x12000, scoped, tag = 'internal scratch']
  %s0 = inlined_call_operand.hbm [shape: f32[2,8,32], index: 0, kind: input, shape index: {}]
  %s1 = inlined_call_operand.hbm [shape: f32[2,8,32], index: 1, kind: input, shape index: {}]
  %s2 = inlined_call_operand.hbm [shape: f32[2,8,32], index: 2, kind: input, shape index: {}]
  %s3 = inlined_call_operand.hbm [shape: f32[2,8,8], index: 3, kind: input, shape index: {}]
  %s4 = inlined_call_operand.hbm [shape: f32[32,32], index: 4, kind: input, shape index: {}]
  %s5 = inlined_call_operand.hbm [shape: f32[32,32], index: 5, kind: input, shape index: {}]
  %s6 = inlined_call_operand.hbm [shape: f32[32,32], index: 6, kind: input, shape index: {}]
  %s7 = inlined_call_operand.hbm [shape: f32[32,32], index: 7, kind: input, shape index: {}]
  %s8 = inlined_call_operand.vmem [shape: f32[1,32], index: 8, kind: input, shape index: {}]
  %s9 = inlined_call_operand.vmem [shape: f32[1,32], index: 9, kind: input, shape index: {}]
  %s10 = inlined_call_operand.hbm [shape: f32[2,8,32], index: 10, kind: output, shape index: {0}]
  %s11 = inlined_call_operand.vmem [shape: f32[2,8,16], index: 11, kind: output, shape index: {1}]
  %12 = xla_tuple %s10, %s11
  %s13 = sld [smem:[#allocation0]]
  $region113: #{multi_head_attention.1} parent=0
    _
  %s15 = ssub.s32 1, %s13
  %s16 = scalar_select 0, %s15, %s13
  $region1: #{multi_head_attention.1} parent=0
    #allocation2 [shape = 'u8[8192]{0}', space=vmem, size = 0x2000, scoped, tag = 'input window, operand 0']
    #allocation3 [shape = 's32[2]{0}', space=sflag, size = 0x8, scoped, tag = 'scoped memory for multi_head_attention.1']
    #allocation4 [shape = 's32[2]{0}', space=sflag, size = 0x8, scoped, tag = 'scoped memory for multi_head_attention.1']
    #allocation5 [shape = 'u8[8192]{0}', space=vmem, size = 0x2000, scoped, tag = 'input window, operand 1']
    #allocation6 [shape = 's32[2]{0}', space=sflag, size = 0x8, scoped, tag = 'scoped memory for multi_head_attention.1']
    #allocation7 [shape = 'u8[8192]{0}', space=vmem, size = 0x2000, scoped, tag = 'input window, operand 2']
    #allocation8 [shape = 'u8[8192]{0}', space=vmem, size = 0x2000, scoped, tag = 'input window, operand 3']
    #allocation9 [shape = 's32[2]{0}', space=sflag, size = 0x8, scoped, tag = 'scoped memory for multi_head_attention.1']
    #allocation10 [shape = 'u8[16384]{0}', space=vmem, size = 0x4000, scoped, tag = 'input window, operand 4, single buffered']
    #allocation11 [shape = 'u8[16384]{0}', space=vmem, size = 0x4000, scoped, tag = 'input window, operand 5, single buffered']
    #allocation12 [shape = 's32[1]{0}', space=sflag, size = 0x4, scoped, tag = 'scoped memory for multi_head_attention.1']
    #allocation13 [shape = 'u8[16384]{0}', space=vmem, size = 0x4000, scoped, tag = 'input window, operand 6, single buffered']
    #allocation14 [shape = 'u8[16384]{0}', space=vmem, size = 0x4000, scoped, tag = 'input window, operand 7, single buffered']
    #allocation15 [shape = 's32[1]{0}', space=sflag, size = 0x4, scoped, tag = 'scoped memory for multi_head_attention.1']
    #allocation16 [shape = 'u8[8192]{0}', space=vmem, size = 0x2000, scoped, tag = 'output window, operand 0']
    %17 = vsyncpa [#allocation3], 0
    %s18 = scalar_lea.sflag [#allocation3], 1
    %19 = vsyncpa %s18, 0
    %20 = vsyncpa [#allocation6], 0
    %s21 = scalar_lea.sflag [#allocation6], 1
    %22 = vsyncpa %s21, 0
    %23 = vsyncpa [#allocation9], 0
    %s24 = scalar_lea.sflag [#allocation9], 1
    %25 = vsyncpa %s24, 0
    %26 = vsyncpa [#allocation12], 0
    %27 = vsyncpa [#allocation15], 0
    %28 = vsyncpa [#allocation4], 0
    %s29 = scalar_lea.sflag [#allocation4], 1
    %30 = vsyncpa %s29, 0
    loop: start=0, step=1, limit=4
    $region2: #{multi_head_attention.1} parent=1 // loop_pre_header
      _
    $region3: #{multi_head_attention.1} parent=1 // loop_header
      %s32 = sphi 0, %s36
      %p33 = scmp.ge.s32.totalorder %s32, 4
      %s42 = sphi 0, %s44
      %s45 = sphi 0, %s42
      %s46 = sphi 0, %s45
      %s62 = sphi 0, %s46
      %s68 = sphi 0, %s70
      %s71 = sphi 0, %s68
      %s72 = sphi 0, %s71
      %s88 = sphi 0, %s72
      %s94 = sphi 0, %s96
      %s97 = sphi 0, %s94
      %s98 = sphi 0, %s97
      %s114 = sphi 0, %s98
      %s120 = sphi 0, %s122
      %s123 = sphi 0, %s120
      %s124 = sphi 0, %s123
      %s140 = sphi 0, %s124
      %s144 = sphi 0, %s144
      %s146 = sphi 0, %s144
      %s147 = sphi 0, %s146
      %s161 = sphi 0, %s147
      %s165 = sphi 0, %s165
      %s167 = sphi 0, %s165
      %s168 = sphi 0, %s167
      %s182 = sphi 0, %s168
      %s186 = sphi 0, %s186
      %s188 = sphi 0, %s186
      %s189 = sphi 0, %s188
      %s203 = sphi 0, %s189
      %s207 = sphi 0, %s207
      %s209 = sphi 0, %s207
      %s210 = sphi 0, %s209
      %s224 = sphi 0, %s210
      %s228 = sphi 0, %s228
      %s230 = sphi 0, %s228
      %s231 = sphi 0, %s230
      %s245 = sphi 0, %s231
      %s249 = sphi 0, %s249
      %s251 = sphi 0, %s249
      %s252 = sphi 0, %s251
      %s266 = sphi 0, %s252
      %s272 = sphi 0, %s274
      %s275 = sphi 0, %s272
      %s276 = sphi 0, %s275
      %s292 = sphi 0, %s276
      %s298 = sphi 0, %s300
      %s301 = sphi 0, %s298
      %s302 = sphi 0, %s301
      %s318 = sphi 0, %s302
    $region4: #{multi_head_attention.1} parent=1 // loop_header_branch
      %35 = sbr.rel (%p33) target = $region8
    $region5: #{multi_head_attention.1} parent=1 // loop_body
      %s37 = ssub.s32 %s32, 1
      %s38 = ssub.s32 %s32, 2
      %s39 = sadd.s32 %s32, 1
      %s40 = ssub.s32 %s32, %s39
      %p41 = scmp.eq.s32.totalorder %s40, 0
      %s43 = sadd.s32 %s42, 1
      %s44 = scalar_select %p41, %s42, %s43
      %p47 = pneg %p41
      %p48 = scmp.eq.s32.totalorder %s32, 1
      %p49 = por %p47, %p48
      %p50 = scmp.ne.s32.totalorder %s42, %s45
      %p51 = scmp.eq.s32.totalorder %s32, 0
      %p52 = por %p50, %p51
      %p53 = scmp.ne.s32.totalorder %s42, %s45
      %p54 = scmp.eq.s32.totalorder %s37, 1
      %p55 = por %p53, %p54
      %p56 = scmp.ne.s32.totalorder %s45, %s46
      %p57 = scmp.eq.s32.totalorder %s37, 0
      %p58 = por %p56, %p57
      %p59 = scmp.ne.s32.totalorder %s45, %s46
      %p60 = scmp.eq.s32.totalorder %s38, 1
      %p61 = por %p59, %p60
      %p63 = scmp.ne.s32.totalorder %s46, %s62
      %p64 = scmp.eq.s32.totalorder %s38, 0
      %p65 = por %p63, %p64
      %s66 = ssub.s32 %s32, %s39
      %p67 = scmp.eq.s32.totalorder %s66, 0
      %s69 = sadd.s32 %s68, 1
      %s70 = scalar_select %p67, %s68, %s69
      %p73 = pneg %p67
      %p74 = scmp.eq.s32.totalorder %s32, 1
      %p75 = por %p73, %p74
      %p76 = scmp.ne.s32.totalorder %s68, %s71
      %p77 = scmp.eq.s32.totalorder %s32, 0
      %p78 = por %p76, %p77
      %p79 = scmp.ne.s32.totalorder %s68, %s71
      %p80 = scmp.eq.s32.totalorder %s37, 1
      %p81 = por %p79, %p80
      %p82 = scmp.ne.s32.totalorder %s71, %s72
      %p83 = scmp.eq.s32.totalorder %s37, 0
      %p84 = por %p82, %p83
      %p85 = scmp.ne.s32.totalorder %s71, %s72
      %p86 = scmp.eq.s32.totalorder %s38, 1
      %p87 = por %p85, %p86
      %p89 = scmp.ne.s32.totalorder %s72, %s88
      %p90 = scmp.eq.s32.totalorder %s38, 0
      %p91 = por %p89, %p90
      %s92 = ssub.s32 %s32, %s39
      %p93 = scmp.eq.s32.totalorder %s92, 0
      %s95 = sadd.s32 %s94, 1
      %s96 = scalar_select %p93, %s94, %s95
      %p99 = pneg %p93
      %p100 = scmp.eq.s32.totalorder %s32, 1
      %p101 = por %p99, %p100
      %p102 = scmp.ne.s32.totalorder %s94, %s97
      %p103 = scmp.eq.s32.totalorder %s32, 0
      %p104 = por %p102, %p103
      %p105 = scmp.ne.s32.totalorder %s94, %s97
      %p106 = scmp.eq.s32.totalorder %s37, 1
      %p107 = por %p105, %p106
      %p108 = scmp.ne.s32.totalorder %s97, %s98
      %p109 = scmp.eq.s32.totalorder %s37, 0
      %p110 = por %p108, %p109
      %p111 = scmp.ne.s32.totalorder %s97, %s98
      %p112 = scmp.eq.s32.totalorder %s38, 1
      %p113 = por %p111, %p112
      %p115 = scmp.ne.s32.totalorder %s98, %s114
      %p116 = scmp.eq.s32.totalorder %s38, 0
      %p117 = por %p115, %p116
      %s118 = ssub.s32 %s32, %s39
      %p119 = scmp.eq.s32.totalorder %s118, 0
      %s121 = sadd.s32 %s120, 1
      %s122 = scalar_select %p119, %s120, %s121
      %p125 = pneg %p119
      %p126 = scmp.eq.s32.totalorder %s32, 1
      %p127 = por %p125, %p126
      %p128 = scmp.ne.s32.totalorder %s120, %s123
      %p129 = scmp.eq.s32.totalorder %s32, 0
      %p130 = por %p128, %p129
      %p131 = scmp.ne.s32.totalorder %s120, %s123
      %p132 = scmp.eq.s32.totalorder %s37, 1
      %p133 = por %p131, %p132
      %p134 = scmp.ne.s32.totalorder %s123, %s124
      %p135 = scmp.eq.s32.totalorder %s37, 0
      %p136 = por %p134, %p135
      %p137 = scmp.ne.s32.totalorder %s123, %s124
      %p138 = scmp.eq.s32.totalorder %s38, 1
      %p139 = por %p137, %p138
      %p141 = scmp.ne.s32.totalorder %s124, %s140
      %p142 = scmp.eq.s32.totalorder %s38, 0
      %p143 = por %p141, %p142
      %s145 = sadd.s32 %s144, 1
      %p148 = scmp.eq.s32.totalorder %s32, 1
      %p149 = scmp.ne.s32.totalorder %s144, %s146
      %p150 = scmp.eq.s32.totalorder %s32, 0
      %p151 = por %p149, %p150
      %p152 = scmp.ne.s32.totalorder %s144, %s146
      %p153 = scmp.eq.s32.totalorder %s37, 1
      %p154 = por %p152, %p153
      %p155 = scmp.ne.s32.totalorder %s146, %s147
      %p156 = scmp.eq.s32.totalorder %s37, 0
      %p157 = por %p155, %p156
      %p158 = scmp.ne.s32.totalorder %s146, %s147
      %p159 = scmp.eq.s32.totalorder %s38, 1
      %p160 = por %p158, %p159
      %p162 = scmp.ne.s32.totalorder %s147, %s161
      %p163 = scmp.eq.s32.totalorder %s38, 0
      %p164 = por %p162, %p163
      %s166 = sadd.s32 %s165, 1
      %p169 = scmp.eq.s32.totalorder %s32, 1
      %p170 = scmp.ne.s32.totalorder %s165, %s167
      %p171 = scmp.eq.s32.totalorder %s32, 0
      %p172 = por %p170, %p171
      %p173 = scmp.ne.s32.totalorder %s165, %s167
      %p174 = scmp.eq.s32.totalorder %s37, 1
      %p175 = por %p173, %p174
      %p176 = scmp.ne.s32.totalorder %s167, %s168
      %p177 = scmp.eq.s32.totalorder %s37, 0
      %p178 = por %p176, %p177
      %p179 = scmp.ne.s32.totalorder %s167, %s168
      %p180 = scmp.eq.s32.totalorder %s38, 1
      %p181 = por %p179, %p180
      %p183 = scmp.ne.s32.totalorder %s168, %s182
      %p184 = scmp.eq.s32.totalorder %s38, 0
      %p185 = por %p183, %p184
      %s187 = sadd.s32 %s186, 1
      %p190 = scmp.eq.s32.totalorder %s32, 1
      %p191 = scmp.ne.s32.totalorder %s186, %s188
      %p192 = scmp.eq.s32.totalorder %s32, 0
      %p193 = por %p191, %p192
      %p194 = scmp.ne.s32.totalorder %s186, %s188
      %p195 = scmp.eq.s32.totalorder %s37, 1
      %p196 = por %p194, %p195
      %p197 = scmp.ne.s32.totalorder %s188, %s189
      %p198 = scmp.eq.s32.totalorder %s37, 0
      %p199 = por %p197, %p198
      %p200 = scmp.ne.s32.totalorder %s188, %s189
      %p201 = scmp.eq.s32.totalorder %s38, 1
      %p202 = por %p200, %p201
      %p204 = scmp.ne.s32.totalorder %s189, %s203
      %p205 = scmp.eq.s32.totalorder %s38, 0
      %p206 = por %p204, %p205
      %s208 = sadd.s32 %s207, 1
      %p211 = scmp.eq.s32.totalorder %s32, 1
      %p212 = scmp.ne.s32.totalorder %s207, %s209
      %p213 = scmp.eq.s32.totalorder %s32, 0
      %p214 = por %p212, %p213
      %p215 = scmp.ne.s32.totalorder %s207, %s209
      %p216 = scmp.eq.s32.totalorder %s37, 1
      %p217 = por %p215, %p216
      %p218 = scmp.ne.s32.totalorder %s209, %s210
      %p219 = scmp.eq.s32.totalorder %s37, 0
      %p220 = por %p218, %p219
      %p221 = scmp.ne.s32.totalorder %s209, %s210
      %p222 = scmp.eq.s32.totalorder %s38, 1
      %p223 = por %p221, %p222
      %p225 = scmp.ne.s32.totalorder %s210, %s224
      %p226 = scmp.eq.s32.totalorder %s38, 0
      %p227 = por %p225, %p226
      %s229 = sadd.s32 %s228, 1
      %p232 = scmp.eq.s32.totalorder %s32, 1
      %p233 = scmp.ne.s32.totalorder %s228, %s230
      %p234 = scmp.eq.s32.totalorder %s32, 0
      %p235 = por %p233, %p234
      %p236 = scmp.ne.s32.totalorder %s228, %s230
      %p237 = scmp.eq.s32.totalorder %s37, 1
      %p238 = por %p236, %p237
      %p239 = scmp.ne.s32.totalorder %s230, %s231
      %p240 = scmp.eq.s32.totalorder %s37, 0
      %p241 = por %p239, %p240
      %p242 = scmp.ne.s32.totalorder %s230, %s231
      %p243 = scmp.eq.s32.totalorder %s38, 1
      %p244 = por %p242, %p243
      %p246 = scmp.ne.s32.totalorder %s231, %s245
      %p247 = scmp.eq.s32.totalorder %s38, 0
      %p248 = por %p246, %p247
      %s250 = sadd.s32 %s249, 1
      %p253 = scmp.eq.s32.totalorder %s32, 1
      %p254 = scmp.ne.s32.totalorder %s249, %s251
      %p255 = scmp.eq.s32.totalorder %s32, 0
      %p256 = por %p254, %p255
      %p257 = scmp.ne.s32.totalorder %s249, %s251
      %p258 = scmp.eq.s32.totalorder %s37, 1
      %p259 = por %p257, %p258
      %p260 = scmp.ne.s32.totalorder %s251, %s252
      %p261 = scmp.eq.s32.totalorder %s37, 0
      %p262 = por %p260, %p261
      %p263 = scmp.ne.s32.totalorder %s251, %s252
      %p264 = scmp.eq.s32.totalorder %s38, 1
      %p265 = por %p263, %p264
      %p267 = scmp.ne.s32.totalorder %s252, %s266
      %p268 = scmp.eq.s32.totalorder %s38, 0
      %p269 = por %p267, %p268
      %s270 = ssub.s32 %s32, %s39
      %p271 = scmp.eq.s32.totalorder %s270, 0
      %s273 = sadd.s32 %s272, 1
      %s274 = scalar_select %p271, %s272, %s273
      %p277 = pneg %p271
      %p278 = scmp.eq.s32.totalorder %s32, 1
      %p279 = por %p277, %p278
      %p280 = scmp.ne.s32.totalorder %s272, %s275
      %p281 = scmp.eq.s32.totalorder %s32, 0
      %p282 = por %p280, %p281
      %p283 = scmp.ne.s32.totalorder %s272, %s275
      %p284 = scmp.eq.s32.totalorder %s37, 1
      %p285 = por %p283, %p284
      %p286 = scmp.ne.s32.totalorder %s275, %s276
      %p287 = scmp.eq.s32.totalorder %s37, 0
      %p288 = por %p286, %p287
      %p289 = scmp.ne.s32.totalorder %s275, %s276
      %p290 = scmp.eq.s32.totalorder %s38, 1
      %p291 = por %p289, %p290
      %p293 = scmp.ne.s32.totalorder %s276, %s292
      %p294 = scmp.eq.s32.totalorder %s38, 0
      %p295 = por %p293, %p294
      %s296 = ssub.s32 %s32, %s39
      %p297 = scmp.eq.s32.totalorder %s296, 0
      %s299 = sadd.s32 %s298, 1
      %s300 = scalar_select %p297, %s298, %s299
      %p303 = pneg %p297
      %p304 = scmp.eq.s32.totalorder %s32, 1
      %p305 = por %p303, %p304
      %p306 = scmp.ne.s32.totalorder %s298, %s301
      %p307 = scmp.eq.s32.totalorder %s32, 0
      %p308 = por %p306, %p307
      %p309 = scmp.ne.s32.totalorder %s298, %s301
      %p310 = scmp.eq.s32.totalorder %s37, 1
      %p311 = por %p309, %p310
      %p312 = scmp.ne.s32.totalorder %s301, %s302
      %p313 = scmp.eq.s32.totalorder %s37, 0
      %p314 = por %p312, %p313
      %p315 = scmp.ne.s32.totalorder %s301, %s302
      %p316 = scmp.eq.s32.totalorder %s38, 1
      %p317 = por %p315, %p316
      %p319 = scmp.ne.s32.totalorder %s302, %s318
      %p320 = scmp.eq.s32.totalorder %s38, 0
      %p321 = por %p319, %p320
      %p322 = scmp.le.s32.totalorder 1, %s32
      %p323 = scmp.lt.s32.totalorder %s32, 3
      %p324 = pnand %p322, %p323
      %p325 = pneg %p324
      // Predicated region
      $region9: #{multi_head_attention.1} parent=5 // pred_check
        _
      $region10: #{multi_head_attention.1} parent=5 // pred_check_branch
        %327 = sbr.rel (%p324) target = $region12
      $region11: #{multi_head_attention.1} parent=5 // pred_region
        %s328 = ssub.s32 %s32, 1
        // Predicated region
        $region13: #{multi_head_attention.1} parent=11 // pred_check
          %p329 = pneg %p157
        $region14: #{multi_head_attention.1} parent=11 // pred_check_branch
          %331 = sbr.rel (%p329) target = $region16
        $region15: #{multi_head_attention.1} parent=11 // pred_region
          %s333 = ssub.s32 512, 512
          %334 = vsyncadd [#allocation9], %s333
          %s335 = sshll.u32 [#allocation10], 4
          %s336 = int_to_ptr.vmem [resolvable:$true] %s335
          %341 = dma.hbm_to_vmem [thread:$0]  %s4, 512, %s336, [#allocation9], 128, 128, 8
        $region16: #{multi_head_attention.1} parent=11 // pred_fallthru
          _
        // Predicated region
        $region17: #{multi_head_attention.1} parent=11 // pred_check
          %p342 = pneg %p178
        $region18: #{multi_head_attention.1} parent=11 // pred_check_branch
          %344 = sbr.rel (%p342) target = $region20
        $region19: #{multi_head_attention.1} parent=11 // pred_region
          %s346 = ssub.s32 512, 512
          %347 = vsyncadd [#allocation12], %s346
          %s348 = sshll.u32 [#allocation11], 4
          %s349 = int_to_ptr.vmem [resolvable:$true] %s348
          %354 = dma.hbm_to_vmem [thread:$0]  %s5, 512, %s349, [#allocation12], 128, 128, 8
        $region20: #{multi_head_attention.1} parent=11 // pred_fallthru
          _
        // Predicated region
        $region21: #{multi_head_attention.1} parent=11 // pred_check
          %p355 = pneg %p199
        $region22: #{multi_head_attention.1} parent=11 // pred_check_branch
          %357 = sbr.rel (%p355) target = $region24
        $region23: #{multi_head_attention.1} parent=11 // pred_region
          %s359 = ssub.s32 512, 512
          %360 = vsyncadd [#allocation12], %s359
          %s361 = sshll.u32 [#allocation13], 4
          %s362 = int_to_ptr.vmem [resolvable:$true] %s361
          %367 = dma.hbm_to_vmem [thread:$0]  %s6, 512, %s362, [#allocation12], 128, 128, 8
        $region24: #{multi_head_attention.1} parent=11 // pred_fallthru
          _
        // Predicated region
        $region25: #{multi_head_attention.1} parent=11 // pred_check
          %p368 = pneg %p220
        $region26: #{multi_head_attention.1} parent=11 // pred_check_branch
          %370 = sbr.rel (%p368) target = $region28
        $region27: #{multi_head_attention.1} parent=11 // pred_region
          %s372 = ssub.s32 512, 512
          %373 = vsyncadd [#allocation15], %s372
          %s374 = sshll.u32 [#allocation14], 4
          %s375 = int_to_ptr.vmem [resolvable:$true] %s374
          %380 = dma.hbm_to_vmem [thread:$0]  %s7, 512, %s375, [#allocation15], 128, 128, 8
        $region28: #{multi_head_attention.1} parent=11 // pred_fallthru
          _
        // Predicated region
        $region29: #{multi_head_attention.1} parent=11 // pred_check
          %p381 = pneg %p241
        $region30: #{multi_head_attention.1} parent=11 // pred_check_branch
          %383 = sbr.rel (%p381) target = $region32
        $region31: #{multi_head_attention.1} parent=11 // pred_region
          _
        $region32: #{multi_head_attention.1} parent=11 // pred_fallthru
          _
        // Predicated region
        $region33: #{multi_head_attention.1} parent=11 // pred_check
          %p384 = pneg %p262
        $region34: #{multi_head_attention.1} parent=11 // pred_check_branch
          %386 = sbr.rel (%p384) target = $region36
        $region35: #{multi_head_attention.1} parent=11 // pred_region
          _
        $region36: #{multi_head_attention.1} parent=11 // pred_fallthru
          _
      $region12: #{multi_head_attention.1} parent=5 // pred_fallthru
        _
      %p387 = scmp.lt.s32.totalorder %s32, 2
      // Predicated region
      $region37: #{multi_head_attention.1} parent=5 // pred_check
        %p388 = pneg %p387
      $region38: #{multi_head_attention.1} parent=5 // pred_check_branch
        %390 = sbr.rel (%p388) target = $region40
      $region39: #{multi_head_attention.1} parent=5 // pred_region
        // Predicated region
        $region41: #{multi_head_attention.1} parent=39 // pred_check
          %p391 = pneg %p52
        $region42: #{multi_head_attention.1} parent=39 // pred_check_branch
          %393 = sbr.rel (%p391) target = $region44
        $region43: #{multi_head_attention.1} parent=39 // pred_region
          %s394 = sand.u32 %s42, 1
          %s395 = scalar_lea.sflag [#allocation3], %s394
          %s396 = sand.u32 %s42, 1
          %s397 = smul.addr %s396, 8
          %s398 = scalar_lea.vmem [#allocation2], %s397
          %s400 = ssub.s32 128, 128
          %401 = vsyncadd %s395, %s400
          %s402 = smul.addr %s32, 128
          %s403 = scalar_lea.hbm %s0, %s402
          %s405 = sshll.u32 %s398, 4
          %s406 = int_to_ptr.vmem [resolvable:$true] %s405
          %408 = dma.hbm_to_vmem [thread:$0]  %s403, 128, %s406, %s395
        $region44: #{multi_head_attention.1} parent=39 // pred_fallthru
          _
        // Predicated region
        $region45: #{multi_head_attention.1} parent=39 // pred_check
          %p409 = pneg %p78
        $region46: #{multi_head_attention.1} parent=39 // pred_check_branch
          %411 = sbr.rel (%p409) target = $region48
        $region47: #{multi_head_attention.1} parent=39 // pred_region
          %s412 = sand.u32 %s32, 1
          %s413 = scalar_lea.sflag [#allocation6], %s412
          %s414 = sand.u32 %s68, 1
          %s415 = smul.addr %s414, 8
          %s416 = scalar_lea.vmem [#allocation5], %s415
          %s418 = ssub.s32 128, 128
          %419 = vsyncadd %s413, %s418
          %s420 = smul.addr %s32, 128
          %s421 = scalar_lea.hbm %s1, %s420
          %s423 = sshll.u32 %s416, 4
          %s424 = int_to_ptr.vmem [resolvable:$true] %s423
          %426 = dma.hbm_to_vmem [thread:$0]  %s421, 128, %s424, %s413
        $region48: #{multi_head_attention.1} parent=39 // pred_fallthru
          _
        // Predicated region
        $region49: #{multi_head_attention.1} parent=39 // pred_check
          %p427 = pneg %p104
        $region50: #{multi_head_attention.1} parent=39 // pred_check_branch
          %429 = sbr.rel (%p427) target = $region52
        $region51: #{multi_head_attention.1} parent=39 // pred_region
          %s430 = sand.u32 %s32, 1
          %s431 = scalar_lea.sflag [#allocation6], %s430
          %s432 = sand.u32 %s94, 1
          %s433 = smul.addr %s432, 8
          %s434 = scalar_lea.vmem [#allocation7], %s433
          %s436 = ssub.s32 128, 128
          %437 = vsyncadd %s431, %s436
          %s438 = smul.addr %s32, 128
          %s439 = scalar_lea.hbm %s2, %s438
          %s441 = sshll.u32 %s434, 4
          %s442 = int_to_ptr.vmem [resolvable:$true] %s441
          %444 = dma.hbm_to_vmem [thread:$0]  %s439, 128, %s442, %s431
        $region52: #{multi_head_attention.1} parent=39 // pred_fallthru
          _
        // Predicated region
        $region53: #{multi_head_attention.1} parent=39 // pred_check
          %p445 = pneg %p130
        $region54: #{multi_head_attention.1} parent=39 // pred_check_branch
          %447 = sbr.rel (%p445) target = $region56
        $region55: #{multi_head_attention.1} parent=39 // pred_region
          %s448 = sand.u32 %s32, 1
          %s449 = scalar_lea.sflag [#allocation9], %s448
          %s450 = sand.u32 %s120, 1
          %s451 = smul.addr %s450, 8
          %s452 = scalar_lea.vmem [#allocation8], %s451
          %s454 = ssub.s32 128, 128
          %455 = vsyncadd %s449, %s454
          %s456 = smul.addr %s32, 128
          %s457 = scalar_lea.hbm %s3, %s456
          %s459 = sshll.u32 %s452, 4
          %s460 = int_to_ptr.vmem [resolvable:$true] %s459
          %462 = dma.hbm_to_vmem [thread:$0]  %s457, 128, %s460, %s449
        $region56: #{multi_head_attention.1} parent=39 // pred_fallthru
          _
      $region40: #{multi_head_attention.1} parent=5 // pred_fallthru
        _
      %p463 = scmp.le.s32.totalorder 1, %s32
      %p464 = scmp.lt.s32.totalorder %s32, 3
      %p465 = pnand %p463, %p464
      %p466 = pneg %p465
      // Predicated region
      $region57: #{multi_head_attention.1} parent=5 // pred_check
        _
      $region58: #{multi_head_attention.1} parent=5 // pred_check_branch
        %468 = sbr.rel (%p465) target = $region60
      $region59: #{multi_head_attention.1} parent=5 // pred_region
        %s469 = ssub.s32 %s32, 1
        %s470 = sand.u32 %s45, 1
        %s471 = scalar_lea.sflag [#allocation3], %s470
        %s472 = sand.u32 %s45, 1
        %s473 = smul.addr %s472, 8
        %s474 = scalar_lea.vmem [#allocation2], %s473
        // Predicated region
        $region61: #{multi_head_attention.1} parent=59 // pred_check
          %p475 = pneg %p58
        $region62: #{multi_head_attention.1} parent=59 // pred_check_branch
          %477 = sbr.rel (%p475) target = $region64
        $region63: #{multi_head_attention.1} parent=59 // pred_region
          %478 = dma.done %s471, 128
        $region64: #{multi_head_attention.1} parent=59 // pred_fallthru
          _
        %s479 = sand.u32 %s37, 1
        %s480 = scalar_lea.sflag [#allocation6], %s479
        %s481 = sand.u32 %s71, 1
        %s482 = smul.addr %s481, 8
        %s483 = scalar_lea.vmem [#allocation5], %s482
        // Predicated region
        $region65: #{multi_head_attention.1} parent=59 // pred_check
          %p484 = pneg %p84
        $region66: #{multi_head_attention.1} parent=59 // pred_check_branch
          %486 = sbr.rel (%p484) target = $region68
        $region67: #{multi_head_attention.1} parent=59 // pred_region
          %487 = dma.done %s480, 128
        $region68: #{multi_head_attention.1} parent=59 // pred_fallthru
          _
        %s488 = sand.u32 %s37, 1
        %s489 = scalar_lea.sflag [#allocation6], %s488
        %s490 = sand.u32 %s97, 1
        %s491 = smul.addr %s490, 8
        %s492 = scalar_lea.vmem [#allocation7], %s491
        // Predicated region
        $region69: #{multi_head_attention.1} parent=59 // pred_check
          %p493 = pneg %p110
        $region70: #{multi_head_attention.1} parent=59 // pred_check_branch
          %495 = sbr.rel (%p493) target = $region72
        $region71: #{multi_head_attention.1} parent=59 // pred_region
          %496 = dma.done %s489, 128
        $region72: #{multi_head_attention.1} parent=59 // pred_fallthru
          _
        %s497 = sand.u32 %s37, 1
        %s498 = scalar_lea.sflag [#allocation9], %s497
        %s499 = sand.u32 %s123, 1
        %s500 = smul.addr %s499, 8
        %s501 = scalar_lea.vmem [#allocation8], %s500
        // Predicated region
        $region73: #{multi_head_attention.1} parent=59 // pred_check
          %p502 = pneg %p136
        $region74: #{multi_head_attention.1} parent=59 // pred_check_branch
          %504 = sbr.rel (%p502) target = $region76
        $region75: #{multi_head_attention.1} parent=59 // pred_region
          %505 = dma.done %s498, 128
        $region76: #{multi_head_attention.1} parent=59 // pred_fallthru
          _
        // Predicated region
        $region77: #{multi_head_attention.1} parent=59 // pred_check
          %p506 = pneg %p157
        $region78: #{multi_head_attention.1} parent=59 // pred_check_branch
          %508 = sbr.rel (%p506) target = $region80
        $region79: #{multi_head_attention.1} parent=59 // pred_region
          %509 = dma.done [#allocation9], 512
        $region80: #{multi_head_attention.1} parent=59 // pred_fallthru
          _
        // Predicated region
        $region81: #{multi_head_attention.1} parent=59 // pred_check
          %p510 = pneg %p178
        $region82: #{multi_head_attention.1} parent=59 // pred_check_branch
          %512 = sbr.rel (%p510) target = $region84
        $region83: #{multi_head_attention.1} parent=59 // pred_region
          %513 = dma.done [#allocation12], 512
        $region84: #{multi_head_attention.1} parent=59 // pred_fallthru
          _
        // Predicated region
        $region85: #{multi_head_attention.1} parent=59 // pred_check
          %p514 = pneg %p199
        $region86: #{multi_head_attention.1} parent=59 // pred_check_branch
          %516 = sbr.rel (%p514) target = $region88
        $region87: #{multi_head_attention.1} parent=59 // pred_region
          %517 = dma.done [#allocation12], 512
        $region88: #{multi_head_attention.1} parent=59 // pred_fallthru
          _
        // Predicated region
        $region89: #{multi_head_attention.1} parent=59 // pred_check
          %p518 = pneg %p220
        $region90: #{multi_head_attention.1} parent=59 // pred_check_branch
          %520 = sbr.rel (%p518) target = $region92
        $region91: #{multi_head_attention.1} parent=59 // pred_region
          %521 = dma.done [#allocation15], 512
        $region92: #{multi_head_attention.1} parent=59 // pred_fallthru
          _
        %s522 = sand.u32 %s45, 1
        %s523 = scalar_lea.sflag [#allocation3], %s522
        %s524 = sand.u32 %s45, 1
        %s525 = smul.addr %s524, 8
        %s526 = scalar_lea.vmem [#allocation2], %s525
        %p527 = pneg %p58
        %p528 = pneg %p55
        %s529 = sand.u32 %s37, 1
        %s530 = scalar_lea.sflag [#allocation6], %s529
        %s531 = sand.u32 %s71, 1
        %s532 = smul.addr %s531, 8
        %s533 = scalar_lea.vmem [#allocation5], %s532
        %p534 = pneg %p84
        %p535 = pneg %p81
        %s536 = sand.u32 %s37, 1
        %s537 = scalar_lea.sflag [#allocation6], %s536
        %s538 = sand.u32 %s97, 1
        %s539 = smul.addr %s538, 8
        %s540 = scalar_lea.vmem [#allocation7], %s539
        %p541 = pneg %p110
        %p542 = pneg %p107
        %s543 = sand.u32 %s37, 1
        %s544 = scalar_lea.sflag [#allocation9], %s543
        %s545 = sand.u32 %s123, 1
        %s546 = smul.addr %s545, 8
        %s547 = scalar_lea.vmem [#allocation8], %s546
        %p548 = pneg %p136
        %p549 = pneg %p133
        %p550 = pneg %p157
        %p551 = pneg %p154
        %p552 = pneg %p178
        %p553 = pneg %p175
        %p554 = pneg %p199
        %p555 = pneg %p196
        %p556 = pneg %p220
        %p557 = pneg %p217
        %p558 = pneg %p241
        %p559 = pneg %p238
        %p560 = pneg %p262
        %p561 = pneg %p259
        %p562 = pneg %p288
        %p563 = pneg %p285
        %s564 = sand.u32 %s275, 1
        %s565 = scalar_lea.sflag [#allocation4], %s564
        %s566 = sand.u32 %s275, 1
        %s567 = smul.addr %s566, 8
        %s568 = scalar_lea.vmem [#allocation16], %s567
        %p569 = pneg %p314
        %p570 = pneg %p311
        %p571 = scmp.lt.s32.totalorder %s37, 1
        %s572 = scalar_select %p571, %s37, 1
        %s573 = smul.addr %s572, 8
        %s574 = scalar_lea.vmem %s11, %s573
        %p575 = scmp.lt.s32.totalorder %s37, 1
        %s576 = scalar_select %p575, %s37, 1
        %s577 = smul.addr %s576, 8
        %s578 = scalar_lea.vmem %s11, %s577
        %v579 = vld [vmem:[%s474] sm:$0xff]
        %v580 = vld [vmem:[%s483] sm:$0xff]
        %v581 = vld [vmem:[%s492] sm:$0xff]
        %v582 = vld [vmem:[%s501] sm:$0xff]
        %vm583 = vcmp.eq.f32.partialorder %v582, 0.0
        %v584 = vld [vmem:[#allocation10] sm:$0xff]
        %v585 = vld [vmem:[#allocation10 + $0x8] sm:$0xff]
        %v586 = vld [vmem:[#allocation10 + $0x10] sm:$0xff]
        %v587 = vld [vmem:[#allocation10 + $0x18] sm:$0xff]
        %vm588 = vcmask 261120
        %v590 = vsel %vm588, %v579, 0
        %592 = vmatprep.subr.mxu0 0.0
        %593 = vmatpush1.msra.mxu0 0.0
        %594 = vmatprep.subr.mxu0 0.0
        %595 = vmatpush1.msra.mxu0 0.0
        %596 = vmatprep.subr.mxu0 0.0
        %597 = vmatpush1.msra.mxu0 0.0
        %598 = vmatprep.subr.mxu0 0.0
        %599 = vmatpush1.msra.mxu0 0.0
        %600 = vmatprep.subr.mxu0 0.0
        %601 = vmatpush1.msra.mxu0 0.0
        %602 = vmatprep.subr.mxu0 0.0
        %603 = vmatpush1.msra.mxu0 0.0
        %604 = vmatprep.subr.mxu0 0.0
        %605 = vmatpush1.msra.mxu0 0.0
        %606 = vmatprep.subr.mxu0 0.0
        %607 = vmatpush1.msra.mxu0 0.0
        %608 = vmatprep.subr.mxu0 0.0
        %609 = vmatpush1.msra.mxu0 0.0
        %610 = vmatprep.subr.mxu0 0.0
        %611 = vmatpush1.msra.mxu0 0.0
        %612 = vmatprep.subr.mxu0 0.0
        %613 = vmatpush1.msra.mxu0 0.0
        %614 = vmatprep.subr.mxu0 0.0
        %615 = vmatpush1.msra.mxu0 0.0
        %616 = vmatprep.subr.mxu0 0.0
        %617 = vmatpush1.msra.mxu0 %v587
        %618 = vmatprep.subr.mxu0 0.0
        %619 = vmatpush1.msra.mxu0 %v586
        %620 = vmatprep.subr.mxu0 0.0
        %621 = vmatpush1.msra.mxu0 %v585
        %622 = vmatprep.subr.mxu0 0.0
        %623 = vmatpush1.msra.mxu0 %v584
        %624 = vmatprep.subr.mxu0 0.0
        %625 = vmatpush2.msra.mxu0 0.0
        %626 = vmatprep.subr.mxu0 0.0
        %627 = vmatpush2.msra.mxu0 0.0
        %628 = vmatprep.subr.mxu0 0.0
        %629 = vmatpush2.msra.mxu0 0.0
        %630 = vmatprep.subr.mxu0 0.0
        %631 = vmatpush2.msra.mxu0 0.0
        %632 = vmatprep.subr.mxu0 0.0
        %633 = vmatpush2.msra.mxu0 0.0
        %634 = vmatprep.subr.mxu0 0.0
        %635 = vmatpush2.msra.mxu0 0.0
        %636 = vmatprep.subr.mxu0 0.0
        %637 = vmatpush2.msra.mxu0 0.0
        %638 = vmatprep.subr.mxu0 0.0
        %639 = vmatpush2.msra.mxu0 0.0
        %640 = vmatprep.subr.mxu0 0.0
        %641 = vmatpush2.msra.mxu0 0.0
        %642 = vmatprep.subr.mxu0 0.0
        %643 = vmatpush2.msra.mxu0 0.0
        %644 = vmatprep.subr.mxu0 0.0
        %645 = vmatpush2.msra.mxu0 0.0
        %646 = vmatprep.subr.mxu0 0.0
        %647 = vmatpush2.msra.mxu0 0.0
        %648 = vmatprep.subr.mxu0 0.0
        %649 = vmatpush2.msra.mxu0 0.0
        %650 = vmatprep.subr.mxu0 0.0
        %651 = vmatpush2.msra.mxu0 0.0
        %652 = vmatprep.subr.mxu0 0.0
        %653 = vmatpush2.msra.mxu0 0.0
        %654 = vmatprep.subr.mxu0 0.0
        %655 = vmatpush2.msra.mxu0 0.0
        %656 = vmatprep.mubr.f32.mxu0 0.0
        %657 = vmatmul.mubr.f32.gmra.mxu0 %v590
        %v658 = vpop.f32.mrf.mxu0
        %v659 = vadd.f32 0.0, %v658
        %v660 = vpop.f32.mrf.mxu0
        %661 = vdwg.mxu0
        %v662 = vmul.f32 %v659, 0.25
        %v663 = vld [vmem:[#allocation11] sm:$0xff]
        %v664 = vld [vmem:[#allocation11 + $0x8] sm:$0xff]
        %v665 = vld [vmem:[#allocation11 + $0x10] sm:$0xff]
        %v666 = vld [vmem:[#allocation11 + $0x18] sm:$0xff]
        %v668 = vsel %vm588, %v580, 0
        %670 = vmatprep.subr.mxu0 0.0
        %671 = vmatpush1.msra.mxu0 0.0
        %672 = vmatprep.subr.mxu0 0.0
        %673 = vmatpush1.msra.mxu0 0.0
        %674 = vmatprep.subr.mxu0 0.0
        %675 = vmatpush1.msra.mxu0 0.0
        %676 = vmatprep.subr.mxu0 0.0
        %677 = vmatpush1.msra.mxu0 0.0
        %678 = vmatprep.subr.mxu0 0.0
        %679 = vmatpush1.msra.mxu0 0.0
        %680 = vmatprep.subr.mxu0 0.0
        %681 = vmatpush1.msra.mxu0 0.0
        %682 = vmatprep.subr.mxu0 0.0
        %683 = vmatpush1.msra.mxu0 0.0
        %684 = vmatprep.subr.mxu0 0.0
        %685 = vmatpush1.msra.mxu0 0.0
        %686 = vmatprep.subr.mxu0 0.0
        %687 = vmatpush1.msra.mxu0 0.0
        %688 = vmatprep.subr.mxu0 0.0
        %689 = vmatpush1.msra.mxu0 0.0
        %690 = vmatprep.subr.mxu0 0.0
        %691 = vmatpush1.msra.mxu0 0.0
        %692 = vmatprep.subr.mxu0 0.0
        %693 = vmatpush1.msra.mxu0 0.0
        %694 = vmatprep.subr.mxu0 0.0
        %695 = vmatpush1.msra.mxu0 %v666
        %696 = vmatprep.subr.mxu0 0.0
        %697 = vmatpush1.msra.mxu0 %v665
        %698 = vmatprep.subr.mxu0 0.0
        %699 = vmatpush1.msra.mxu0 %v664
        %700 = vmatprep.subr.mxu0 0.0
        %701 = vmatpush1.msra.mxu0 %v663
        %702 = vmatprep.subr.mxu0 0.0
        %703 = vmatpush2.msra.mxu0 0.0
        %704 = vmatprep.subr.mxu0 0.0
        %705 = vmatpush2.msra.mxu0 0.0
        %706 = vmatprep.subr.mxu0 0.0
        %707 = vmatpush2.msra.mxu0 0.0
        %708 = vmatprep.subr.mxu0 0.0
        %709 = vmatpush2.msra.mxu0 0.0
        %710 = vmatprep.subr.mxu0 0.0
        %711 = vmatpush2.msra.mxu0 0.0
        %712 = vmatprep.subr.mxu0 0.0
        %713 = vmatpush2.msra.mxu0 0.0
        %714 = vmatprep.subr.mxu0 0.0
        %715 = vmatpush2.msra.mxu0 0.0
        %716 = vmatprep.subr.mxu0 0.0
        %717 = vmatpush2.msra.mxu0 0.0
        %718 = vmatprep.subr.mxu0 0.0
        %719 = vmatpush2.msra.mxu0 0.0
        %720 = vmatprep.subr.mxu0 0.0
        %721 = vmatpush2.msra.mxu0 0.0
        %722 = vmatprep.subr.mxu0 0.0
        %723 = vmatpush2.msra.mxu0 0.0
        %724 = vmatprep.subr.mxu0 0.0
        %725 = vmatpush2.msra.mxu0 0.0
        %726 = vmatprep.subr.mxu0 0.0
        %727 = vmatpush2.msra.mxu0 0.0
        %728 = vmatprep.subr.mxu0 0.0
        %729 = vmatpush2.msra.mxu0 0.0
        %730 = vmatprep.subr.mxu0 0.0
        %731 = vmatpush2.msra.mxu0 0.0
        %732 = vmatprep.subr.mxu0 0.0
        %733 = vmatpush2.msra.mxu0 0.0
        %734 = vmatprep.mubr.f32.mxu0 0.0
        %735 = vmatmul.mubr.f32.gmra.mxu0 %v668
        %v736 = vpop.f32.mrf.mxu0
        %v737 = vadd.f32 0.0, %v736
        %v738 = vpop.f32.mrf.mxu0
        %739 = vdwg.mxu0
        %v740 = vld [vmem:[#allocation13] sm:$0xff]
        %v741 = vld [vmem:[#allocation13 + $0x8] sm:$0xff]
        %v742 = vld [vmem:[#allocation13 + $0x10] sm:$0xff]
        %v743 = vld [vmem:[#allocation13 + $0x18] sm:$0xff]
        %v745 = vsel %vm588, %v581, 0
        %747 = vmatprep.subr.mxu0 0.0
        %748 = vmatpush1.msra.mxu0 0.0
        %749 = vmatprep.subr.mxu0 0.0
        %750 = vmatpush1.msra.mxu0 0.0
        %751 = vmatprep.subr.mxu0 0.0
        %752 = vmatpush1.msra.mxu0 0.0
        %753 = vmatprep.subr.mxu0 0.0
        %754 = vmatpush1.msra.mxu0 0.0
        %755 = vmatprep.subr.mxu0 0.0
        %756 = vmatpush1.msra.mxu0 0.0
        %757 = vmatprep.subr.mxu0 0.0
        %758 = vmatpush1.msra.mxu0 0.0
        %759 = vmatprep.subr.mxu0 0.0
        %760 = vmatpush1.msra.mxu0 0.0
        %761 = vmatprep.subr.mxu0 0.0
        %762 = vmatpush1.msra.mxu0 0.0
        %763 = vmatprep.subr.mxu0 0.0
        %764 = vmatpush1.msra.mxu0 0.0
        %765 = vmatprep.subr.mxu0 0.0
        %766 = vmatpush1.msra.mxu0 0.0
        %767 = vmatprep.subr.mxu0 0.0
        %768 = vmatpush1.msra.mxu0 0.0
        %769 = vmatprep.subr.mxu0 0.0
        %770 = vmatpush1.msra.mxu0 0.0
        %771 = vmatprep.subr.mxu0 0.0
        %772 = vmatpush1.msra.mxu0 %v743
        %773 = vmatprep.subr.mxu0 0.0
        %774 = vmatpush1.msra.mxu0 %v742
        %775 = vmatprep.subr.mxu0 0.0
        %776 = vmatpush1.msra.mxu0 %v741
        %777 = vmatprep.subr.mxu0 0.0
        %778 = vmatpush1.msra.mxu0 %v740
        %779 = vmatprep.subr.mxu0 0.0
        %780 = vmatpush2.msra.mxu0 0.0
        %781 = vmatprep.subr.mxu0 0.0
        %782 = vmatpush2.msra.mxu0 0.0
        %783 = vmatprep.subr.mxu0 0.0
        %784 = vmatpush2.msra.mxu0 0.0
        %785 = vmatprep.subr.mxu0 0.0
        %786 = vmatpush2.msra.mxu0 0.0
        %787 = vmatprep.subr.mxu0 0.0
        %788 = vmatpush2.msra.mxu0 0.0
        %789 = vmatprep.subr.mxu0 0.0
        %790 = vmatpush2.msra.mxu0 0.0
        %791 = vmatprep.subr.mxu0 0.0
        %792 = vmatpush2.msra.mxu0 0.0
        %793 = vmatprep.subr.mxu0 0.0
        %794 = vmatpush2.msra.mxu0 0.0
        %795 = vmatprep.subr.mxu0 0.0
        %796 = vmatpush2.msra.mxu0 0.0
        %797 = vmatprep.subr.mxu0 0.0
        %798 = vmatpush2.msra.mxu0 0.0
        %799 = vmatprep.subr.mxu0 0.0
        %800 = vmatpush2.msra.mxu0 0.0
        %801 = vmatprep.subr.mxu0 0.0
        %802 = vmatpush2.msra.mxu0 0.0
        %803 = vmatprep.subr.mxu0 0.0
        %804 = vmatpush2.msra.mxu0 0.0
        %805 = vmatprep.subr.mxu0 0.0
        %806 = vmatpush2.msra.mxu0 0.0
        %807 = vmatprep.subr.mxu0 0.0
        %808 = vmatpush2.msra.mxu0 0.0
        %809 = vmatprep.subr.mxu0 0.0
        %810 = vmatpush2.msra.mxu0 0.0
        %811 = vmatprep.mubr.f32.mxu0 0.0
        %812 = vmatmul.mubr.f32.gmra.mxu0 %v745
        %v813 = vpop.f32.mrf.mxu0
        %v814 = vadd.f32 0.0, %v813
        %v815 = vpop.f32.mrf.mxu0
        %816 = vdwg.mxu0
        %vm817 = vcmask 130048
        %v819 = vsel %vm817, %v662, 0
        %v822 = vsel %vm817, %v737, 0
        %824 = vmatprep.subr.mxu0 0.0
        %825 = vmatpush1.xpose.msra.mxu0 0.0
        %826 = vmatprep.subr.mxu0 0.0
        %827 = vmatpush1.xpose.msra.mxu0 0.0
        %828 = vmatprep.subr.mxu0 0.0
        %829 = vmatpush1.xpose.msra.mxu0 0.0
        %830 = vmatprep.subr.mxu0 0.0
        %831 = vmatpush1.xpose.msra.mxu0 0.0
        %832 = vmatprep.subr.mxu0 0.0
        %833 = vmatpush1.xpose.msra.mxu0 0.0
        %834 = vmatprep.subr.mxu0 0.0
        %835 = vmatpush1.xpose.msra.mxu0 0.0
        %836 = vmatprep.subr.mxu0 0.0
        %837 = vmatpush1.xpose.msra.mxu0 0.0
        %838 = vmatprep.subr.mxu0 0.0
        %839 = vmatpush1.xpose.msra.mxu0 0.0
        %840 = vmatprep.subr.mxu0 0.0
        %841 = vmatpush1.xpose.msra.mxu0 0.0
        %842 = vmatprep.subr.mxu0 0.0
        %843 = vmatpush1.xpose.msra.mxu0 0.0
        %844 = vmatprep.subr.mxu0 0.0
        %845 = vmatpush1.xpose.msra.mxu0 0.0
        %846 = vmatprep.subr.mxu0 0.0
        %847 = vmatpush1.xpose.msra.mxu0 0.0
        %848 = vmatprep.subr.mxu0 0.0
        %849 = vmatpush1.xpose.msra.mxu0 0.0
        %850 = vmatprep.subr.mxu0 0.0
        %851 = vmatpush1.xpose.msra.mxu0 0.0
        %852 = vmatprep.subr.mxu0 0.0
        %853 = vmatpush1.xpose.msra.mxu0 0.0
        %854 = vmatprep.subr.mxu0 0.0
        %855 = vmatpush1.xpose.msra.mxu0 %v822
        %856 = vmatprep.subr.mxu0 0.0
        %857 = vmatpush2.xpose.msra.mxu0 0.0
        %858 = vmatprep.subr.mxu0 0.0
        %859 = vmatpush2.xpose.msra.mxu0 0.0
        %860 = vmatprep.subr.mxu0 0.0
        %861 = vmatpush2.xpose.msra.mxu0 0.0
        %862 = vmatprep.subr.mxu0 0.0
        %863 = vmatpush2.xpose.msra.mxu0 0.0
        %864 = vmatprep.subr.mxu0 0.0
        %865 = vmatpush2.xpose.msra.mxu0 0.0
        %866 = vmatprep.subr.mxu0 0.0
        %867 = vmatpush2.xpose.msra.mxu0 0.0
        %868 = vmatprep.subr.mxu0 0.0
        %869 = vmatpush2.xpose.msra.mxu0 0.0
        %870 = vmatprep.subr.mxu0 0.0
        %871 = vmatpush2.xpose.msra.mxu0 0.0
        %872 = vmatprep.subr.mxu0 0.0
        %873 = vmatpush2.xpose.msra.mxu0 0.0
        %874 = vmatprep.subr.mxu0 0.0
        %875 = vmatpush2.xpose.msra.mxu0 0.0
        %876 = vmatprep.subr.mxu0 0.0
        %877 = vmatpush2.xpose.msra.mxu0 0.0
        %878 = vmatprep.subr.mxu0 0.0
        %879 = vmatpush2.xpose.msra.mxu0 0.0
        %880 = vmatprep.subr.mxu0 0.0
        %881 = vmatpush2.xpose.msra.mxu0 0.0
        %882 = vmatprep.subr.mxu0 0.0
        %883 = vmatpush2.xpose.msra.mxu0 0.0
        %884 = vmatprep.subr.mxu0 0.0
        %885 = vmatpush2.xpose.msra.mxu0 0.0
        %886 = vmatprep.subr.mxu0 0.0
        %887 = vmatpush2.xpose.msra.mxu0 0.0
        %888 = vmatprep.mubr.f32.mxu0 0.0
        %889 = vmatmul.mubr.f32.gmra.mxu0 %v819
        %v890 = vpop.f32.mrf.mxu0
        %v891 = vadd.f32 0.0, %v890
        %v892 = vpop.f32.mrf.mxu0
        %893 = vdwg.mxu0
        %v894 = vsel %vm583, -1e+09, %v891
        %vm895 = vcmask 64512
        %v896 = vsel %vm895, %v894, -inf
        %897 = vmax.xlane.f32.xlu0 %v896
        %v898 = vpop.xlane.xlu0 %897
        %v899 = vsub.f32 %v894, %v898
        %v900 = vmul.f32 %v899, 1.442695
        %v901 = vpow.pop %v900
        %v902 = vsel %vm895, %v901, 0.0
        %903 = vadd.xlane.f32.xlu0 %v902
        %v904 = vpop.xlane.xlu0 %903
        %v905 = vrcp.pop %v904
        %v906 = vmul.f32 %v901, %v905
        %907 = vst.msk [vmem:[%s578] sm:$0xff] %vm895, %v906
        %v909 = vsel %vm895, %v906, 0
        %911 = vmatprep.subr.mxu0 0.0
        %912 = vmatpush1.msra.mxu0 0.0
        %913 = vmatprep.subr.mxu0 0.0
        %914 = vmatpush1.msra.mxu0 0.0
        %915 = vmatprep.subr.mxu0 0.0
        %916 = vmatpush1.msra.mxu0 0.0
        %917 = vmatprep.subr.mxu0 0.0
        %918 = vmatpush1.msra.mxu0 0.0
        %919 = vmatprep.subr.mxu0 0.0
        %920 = vmatpush1.msra.mxu0 0.0
        %921 = vmatprep.subr.mxu0 0.0
        %922 = vmatpush1.msra.mxu0 0.0
        %923 = vmatprep.subr.mxu0 0.0
        %924 = vmatpush1.msra.mxu0 0.0
        %925 = vmatprep.subr.mxu0 0.0
        %926 = vmatpush1.msra.mxu0 0.0
        %927 = vmatprep.subr.mxu0 0.0
        %928 = vmatpush1.msra.mxu0 0.0
        %929 = vmatprep.subr.mxu0 0.0
        %930 = vmatpush1.msra.mxu0 0.0
        %931 = vmatprep.subr.mxu0 0.0
        %932 = vmatpush1.msra.mxu0 0.0
        %933 = vmatprep.subr.mxu0 0.0
        %934 = vmatpush1.msra.mxu0 0.0
        %935 = vmatprep.subr.mxu0 0.0
        %936 = vmatpush1.msra.mxu0 0.0
        %937 = vmatprep.subr.mxu0 0.0
        %938 = vmatpush1.msra.mxu0 0.0
        %939 = vmatprep.subr.mxu0 0.0
        %940 = vmatpush1.msra.mxu0 0.0
        %941 = vmatprep.subr.mxu0 0.0
        %942 = vmatpush1.msra.mxu0 %v814
        %943 = vmatprep.subr.mxu0 0.0
        %944 = vmatpush2.msra.mxu0 0.0
        %945 = vmatprep.subr.mxu0 0.0
        %946 = vmatpush2.msra.mxu0 0.0
        %947 = vmatprep.subr.mxu0 0.0
        %948 = vmatpush2.msra.mxu0 0.0
        %949 = vmatprep.subr.mxu0 0.0
        %950 = vmatpush2.msra.mxu0 0.0
        %951 = vmatprep.subr.mxu0 0.0
        %952 = vmatpush2.msra.mxu0 0.0
        %953 = vmatprep.subr.mxu0 0.0
        %954 = vmatpush2.msra.mxu0 0.0
        %955 = vmatprep.subr.mxu0 0.0
        %956 = vmatpush2.msra.mxu0 0.0
        %957 = vmatprep.subr.mxu0 0.0
        %958 = vmatpush2.msra.mxu0 0.0
        %959 = vmatprep.subr.mxu0 0.0
        %960 = vmatpush2.msra.mxu0 0.0
        %961 = vmatprep.subr.mxu0 0.0
        %962 = vmatpush2.msra.mxu0 0.0
        %963 = vmatprep.subr.mxu0 0.0
        %964 = vmatpush2.msra.mxu0 0.0
        %965 = vmatprep.subr.mxu0 0.0
        %966 = vmatpush2.msra.mxu0 0.0
        %967 = vmatprep.subr.mxu0 0.0
        %968 = vmatpush2.msra.mxu0 0.0
        %969 = vmatprep.subr.mxu0 0.0
        %970 = vmatpush2.msra.mxu0 0.0
        %971 = vmatprep.subr.mxu0 0.0
        %972 = vmatpush2.msra.mxu0 0.0
        %973 = vmatprep.subr.mxu0 0.0
        %974 = vmatpush2.msra.mxu0 0.0
        %975 = vmatprep.mubr.f32.mxu0 0.0
        %976 = vmatmul.mubr.f32.gmra.mxu0 %v909
        %v977 = vpop.f32.mrf.mxu0
        %v978 = vadd.f32 0.0, %v977
        %v979 = vpop.f32.mrf.mxu0
        %980 = vdwg.mxu0
        %v981 = vld [vmem:[#allocation14] sm:$0xff]
        %v982 = vld [vmem:[#allocation14 + $0x8] sm:$0xff]
        %983 = vrot.lane.b32.xlu0 %v662, 112
        %v984 = vpop.permute.xlu0 %983
        %985 = vrot.lane.b32.xlu0 %v737, 112
        %v986 = vpop.permute.xlu0 %985
        %v987 = vsel %vm817, %v984, 0
        %v989 = vsel %vm817, %v986, 0
        %991 = vmatprep.subr.mxu0 0.0
        %992 = vmatpush1.xpose.msra.mxu0 0.0
        %993 = vmatprep.subr.mxu0 0.0
        %994 = vmatpush1.xpose.msra.mxu0 0.0
        %995 = vmatprep.subr.mxu0 0.0
        %996 = vmatpush1.xpose.msra.mxu0 0.0
        %997 = vmatprep.subr.mxu0 0.0
        %998 = vmatpush1.xpose.msra.mxu0 0.0
        %999 = vmatprep.subr.mxu0 0.0
        %1000 = vmatpush1.xpose.msra.mxu0 0.0
        %1001 = vmatprep.subr.mxu0 0.0
        %1002 = vmatpush1.xpose.msra.mxu0 0.0
        %1003 = vmatprep.subr.mxu0 0.0
        %1004 = vmatpush1.xpose.msra.mxu0 0.0
        %1005 = vmatprep.subr.mxu0 0.0
        %1006 = vmatpush1.xpose.msra.mxu0 0.0
        %1007 = vmatprep.subr.mxu0 0.0
        %1008 = vmatpush1.xpose.msra.mxu0 0.0
        %1009 = vmatprep.subr.mxu0 0.0
        %1010 = vmatpush1.xpose.msra.mxu0 0.0
        %1011 = vmatprep.subr.mxu0 0.0
        %1012 = vmatpush1.xpose.msra.mxu0 0.0
        %1013 = vmatprep.subr.mxu0 0.0
        %1014 = vmatpush1.xpose.msra.mxu0 0.0
        %1015 = vmatprep.subr.mxu0 0.0
        %1016 = vmatpush1.xpose.msra.mxu0 0.0
        %1017 = vmatprep.subr.mxu0 0.0
        %1018 = vmatpush1.xpose.msra.mxu0 0.0
        %1019 = vmatprep.subr.mxu0 0.0
        %1020 = vmatpush1.xpose.msra.mxu0 0.0
        %1021 = vmatprep.subr.mxu0 0.0
        %1022 = vmatpush1.xpose.msra.mxu0 %v989
        %1023 = vmatprep.subr.mxu0 0.0
        %1024 = vmatpush2.xpose.msra.mxu0 0.0
        %1025 = vmatprep.subr.mxu0 0.0
        %1026 = vmatpush2.xpose.msra.mxu0 0.0
        %1027 = vmatprep.subr.mxu0 0.0
        %1028 = vmatpush2.xpose.msra.mxu0 0.0
        %1029 = vmatprep.subr.mxu0 0.0
        %1030 = vmatpush2.xpose.msra.mxu0 0.0
        %1031 = vmatprep.subr.mxu0 0.0
        %1032 = vmatpush2.xpose.msra.mxu0 0.0
        %1033 = vmatprep.subr.mxu0 0.0
        %1034 = vmatpush2.xpose.msra.mxu0 0.0
        %1035 = vmatprep.subr.mxu0 0.0
        %1036 = vmatpush2.xpose.msra.mxu0 0.0
        %1037 = vmatprep.subr.mxu0 0.0
        %1038 = vmatpush2.xpose.msra.mxu0 0.0
        %1039 = vmatprep.subr.mxu0 0.0
        %1040 = vmatpush2.xpose.msra.mxu0 0.0
        %1041 = vmatprep.subr.mxu0 0.0
        %1042 = vmatpush2.xpose.msra.mxu0 0.0
        %1043 = vmatprep.subr.mxu0 0.0
        %1044 = vmatpush2.xpose.msra.mxu0 0.0
        %1045 = vmatprep.subr.mxu0 0.0
        %1046 = vmatpush2.xpose.msra.mxu0 0.0
        %1047 = vmatprep.subr.mxu0 0.0
        %1048 = vmatpush2.xpose.msra.mxu0 0.0
        %1049 = vmatprep.subr.mxu0 0.0
        %1050 = vmatpush2.xpose.msra.mxu0 0.0
        %1051 = vmatprep.subr.mxu0 0.0
        %1052 = vmatpush2.xpose.msra.mxu0 0.0
        %1053 = vmatprep.subr.mxu0 0.0
        %1054 = vmatpush2.xpose.msra.mxu0 0.0
        %1055 = vmatprep.mubr.f32.mxu0 0.0
        %1056 = vmatmul.mubr.f32.gmra.mxu0 %v987
        %v1057 = vpop.f32.mrf.mxu0
        %v1058 = vadd.f32 0.0, %v1057
        %v1059 = vpop.f32.mrf.mxu0
        %1060 = vdwg.mxu0
        %v1061 = vsel %vm583, -1e+09, %v1058
        %v1062 = vsel %vm895, %v1061, -inf
        %1063 = vmax.xlane.f32.xlu0 %v1062
        %v1064 = vpop.xlane.xlu0 %1063
        %v1065 = vsub.f32 %v1061, %v1064
        %v1066 = vmul.f32 %v1065, 1.442695
        %v1067 = vpow.pop %v1066
        %v1068 = vsel %vm895, %v1067, 0.0
        %1069 = vadd.xlane.f32.xlu0 %v1068
        %v1070 = vpop.xlane.xlu0 %1069
        %v1071 = vrcp.pop %v1070
        %v1072 = vmul.f32 %v1067, %v1071
        %1074 = vrot.lane.b32.xlu0 %v1072, 8
        %v1075 = vpop.permute.xlu0 %1074
        %vm1077 = vcmask 130112
        %1078 = vst.msk [vmem:[%s578] sm:$0xff] %vm1077, %v1075
        %1080 = vrot.lane.b32.xlu0 %v814, 112
        %v1081 = vpop.permute.xlu0 %1080
        %v1083 = vsel %vm895, %v1072, 0
        %1085 = vmatprep.subr.mxu0 0.0
        %1086 = vmatpush1.msra.mxu0 0.0
        %1087 = vmatprep.subr.mxu0 0.0
        %1088 = vmatpush1.msra.mxu0 0.0
        %1089 = vmatprep.subr.mxu0 0.0
        %1090 = vmatpush1.msra.mxu0 0.0
        %1091 = vmatprep.subr.mxu0 0.0
        %1092 = vmatpush1.msra.mxu0 0.0
        %1093 = vmatprep.subr.mxu0 0.0
        %1094 = vmatpush1.msra.mxu0 0.0
        %1095 = vmatprep.subr.mxu0 0.0
        %1096 = vmatpush1.msra.mxu0 0.0
        %1097 = vmatprep.subr.mxu0 0.0
        %1098 = vmatpush1.msra.mxu0 0.0
        %1099 = vmatprep.subr.mxu0 0.0
        %1100 = vmatpush1.msra.mxu0 0.0
        %1101 = vmatprep.subr.mxu0 0.0
        %1102 = vmatpush1.msra.mxu0 0.0
        %1103 = vmatprep.subr.mxu0 0.0
        %1104 = vmatpush1.msra.mxu0 0.0
        %1105 = vmatprep.subr.mxu0 0.0
        %1106 = vmatpush1.msra.mxu0 0.0
        %1107 = vmatprep.subr.mxu0 0.0
        %1108 = vmatpush1.msra.mxu0 0.0
        %1109 = vmatprep.subr.mxu0 0.0
        %1110 = vmatpush1.msra.mxu0 0.0
        %1111 = vmatprep.subr.mxu0 0.0
        %1112 = vmatpush1.msra.mxu0 0.0
        %1113 = vmatprep.subr.mxu0 0.0
        %1114 = vmatpush1.msra.mxu0 0.0
        %1115 = vmatprep.subr.mxu0 0.0
        %1116 = vmatpush1.msra.mxu0 %v1081
        %1117 = vmatprep.subr.mxu0 0.0
        %1118 = vmatpush2.msra.mxu0 0.0
        %1119 = vmatprep.subr.mxu0 0.0
        %1120 = vmatpush2.msra.mxu0 0.0
        %1121 = vmatprep.subr.mxu0 0.0
        %1122 = vmatpush2.msra.mxu0 0.0
        %1123 = vmatprep.subr.mxu0 0.0
        %1124 = vmatpush2.msra.mxu0 0.0
        %1125 = vmatprep.subr.mxu0 0.0
        %1126 = vmatpush2.msra.mxu0 0.0
        %1127 = vmatprep.subr.mxu0 0.0
        %1128 = vmatpush2.msra.mxu0 0.0
        %1129 = vmatprep.subr.mxu0 0.0
        %1130 = vmatpush2.msra.mxu0 0.0
        %1131 = vmatprep.subr.mxu0 0.0
        %1132 = vmatpush2.msra.mxu0 0.0
        %1133 = vmatprep.subr.mxu0 0.0
        %1134 = vmatpush2.msra.mxu0 0.0
        %1135 = vmatprep.subr.mxu0 0.0
        %1136 = vmatpush2.msra.mxu0 0.0
        %1137 = vmatprep.subr.mxu0 0.0
        %1138 = vmatpush2.msra.mxu0 0.0
        %1139 = vmatprep.subr.mxu0 0.0
        %1140 = vmatpush2.msra.mxu0 0.0
        %1141 = vmatprep.subr.mxu0 0.0
        %1142 = vmatpush2.msra.mxu0 0.0
        %1143 = vmatprep.subr.mxu0 0.0
        %1144 = vmatpush2.msra.mxu0 0.0
        %1145 = vmatprep.subr.mxu0 0.0
        %1146 = vmatpush2.msra.mxu0 0.0
        %1147 = vmatprep.subr.mxu0 0.0
        %1148 = vmatpush2.msra.mxu0 0.0
        %1149 = vmatprep.mubr.f32.mxu0 0.0
        %1150 = vmatmul.mubr.f32.gmra.mxu0 %v1083
        %v1151 = vpop.f32.mrf.mxu0
        %v1152 = vadd.f32 0.0, %v1151
        %v1153 = vpop.f32.mrf.mxu0
        %1154 = vdwg.mxu0
        %v1155 = vld [vmem:[#allocation14 + $0x10] sm:$0xff]
        %v1156 = vld [vmem:[#allocation14 + $0x18] sm:$0xff]
        %v1158 = vsel %vm817, %v1152, 0
        %1160 = vmatprep.subr.mxu0 0.0
        %1161 = vmatpush1.msra.mxu0 0.0
        %1162 = vmatprep.subr.mxu0 0.0
        %1163 = vmatpush1.msra.mxu0 0.0
        %1164 = vmatprep.subr.mxu0 0.0
        %1165 = vmatpush1.msra.mxu0 0.0
        %1166 = vmatprep.subr.mxu0 0.0
        %1167 = vmatpush1.msra.mxu0 0.0
        %1168 = vmatprep.subr.mxu0 0.0
        %1169 = vmatpush1.msra.mxu0 0.0
        %1170 = vmatprep.subr.mxu0 0.0
        %1171 = vmatpush1.msra.mxu0 0.0
        %1172 = vmatprep.subr.mxu0 0.0
        %1173 = vmatpush1.msra.mxu0 0.0
        %1174 = vmatprep.subr.mxu0 0.0
        %1175 = vmatpush1.msra.mxu0 0.0
        %1176 = vmatprep.subr.mxu0 0.0
        %1177 = vmatpush1.msra.mxu0 0.0
        %1178 = vmatprep.subr.mxu0 0.0
        %1179 = vmatpush1.msra.mxu0 0.0
        %1180 = vmatprep.subr.mxu0 0.0
        %1181 = vmatpush1.msra.mxu0 0.0
        %1182 = vmatprep.subr.mxu0 0.0
        %1183 = vmatpush1.msra.mxu0 0.0
        %1184 = vmatprep.subr.mxu0 0.0
        %1185 = vmatpush1.msra.mxu0 0.0
        %1186 = vmatprep.subr.mxu0 0.0
        %1187 = vmatpush1.msra.mxu0 0.0
        %1188 = vmatprep.subr.mxu0 0.0
        %1189 = vmatpush1.msra.mxu0 %v1156
        %1190 = vmatprep.subr.mxu0 0.0
        %1191 = vmatpush1.msra.mxu0 %v1155
        %1192 = vmatprep.subr.mxu0 0.0
        %1193 = vmatpush2.msra.mxu0 0.0
        %1194 = vmatprep.subr.mxu0 0.0
        %1195 = vmatpush2.msra.mxu0 0.0
        %1196 = vmatprep.subr.mxu0 0.0
        %1197 = vmatpush2.msra.mxu0 0.0
        %1198 = vmatprep.subr.mxu0 0.0
        %1199 = vmatpush2.msra.mxu0 0.0
        %1200 = vmatprep.subr.mxu0 0.0
        %1201 = vmatpush2.msra.mxu0 0.0
        %1202 = vmatprep.subr.mxu0 0.0
        %1203 = vmatpush2.msra.mxu0 0.0
        %1204 = vmatprep.subr.mxu0 0.0
        %1205 = vmatpush2.msra.mxu0 0.0
        %1206 = vmatprep.subr.mxu0 0.0
        %1207 = vmatpush2.msra.mxu0 0.0
        %1208 = vmatprep.subr.mxu0 0.0
        %1209 = vmatpush2.msra.mxu0 0.0
        %1210 = vmatprep.subr.mxu0 0.0
        %1211 = vmatpush2.msra.mxu0 0.0
        %1212 = vmatprep.subr.mxu0 0.0
        %1213 = vmatpush2.msra.mxu0 0.0
        %1214 = vmatprep.subr.mxu0 0.0
        %1215 = vmatpush2.msra.mxu0 0.0
        %1216 = vmatprep.subr.mxu0 0.0
        %1217 = vmatpush2.msra.mxu0 0.0
        %1218 = vmatprep.subr.mxu0 0.0
        %1219 = vmatpush2.msra.mxu0 0.0
        %1220 = vmatprep.subr.mxu0 0.0
        %1221 = vmatpush2.msra.mxu0 0.0
        %1222 = vmatprep.subr.mxu0 0.0
        %1223 = vmatpush2.msra.mxu0 0.0
        %1224 = vmatprep.mubr.f32.mxu0 0.0
        %1225 = vmatmul.mubr.f32.gmra.mxu0 %v1158
        %v1226 = vpop.f32.mrf.mxu0
        %v1227 = vadd.f32 0.0, %v1226
        %v1228 = vpop.f32.mrf.mxu0
        %1229 = vdwg.mxu0
        %v1231 = vsel %vm817, %v978, 0
        %1233 = vmatprep.subr.mxu0 0.0
        %1234 = vmatpush1.msra.mxu0 0.0
        %1235 = vmatprep.subr.mxu0 0.0
        %1236 = vmatpush1.msra.mxu0 0.0
        %1237 = vmatprep.subr.mxu0 0.0
        %1238 = vmatpush1.msra.mxu0 0.0
        %1239 = vmatprep.subr.mxu0 0.0
        %1240 = vmatpush1.msra.mxu0 0.0
        %1241 = vmatprep.subr.mxu0 0.0
        %1242 = vmatpush1.msra.mxu0 0.0
        %1243 = vmatprep.subr.mxu0 0.0
        %1244 = vmatpush1.msra.mxu0 0.0
        %1245 = vmatprep.subr.mxu0 0.0
        %1246 = vmatpush1.msra.mxu0 0.0
        %1247 = vmatprep.subr.mxu0 0.0
        %1248 = vmatpush1.msra.mxu0 0.0
        %1249 = vmatprep.subr.mxu0 0.0
        %1250 = vmatpush1.msra.mxu0 0.0
        %1251 = vmatprep.subr.mxu0 0.0
        %1252 = vmatpush1.msra.mxu0 0.0
        %1253 = vmatprep.subr.mxu0 0.0
        %1254 = vmatpush1.msra.mxu0 0.0
        %1255 = vmatprep.subr.mxu0 0.0
        %1256 = vmatpush1.msra.mxu0 0.0
        %1257 = vmatprep.subr.mxu0 0.0
        %1258 = vmatpush1.msra.mxu0 0.0
        %1259 = vmatprep.subr.mxu0 0.0
        %1260 = vmatpush1.msra.mxu0 0.0
        %1261 = vmatprep.subr.mxu0 0.0
        %1262 = vmatpush1.msra.mxu0 %v982
        %1263 = vmatprep.subr.mxu0 0.0
        %1264 = vmatpush1.msra.mxu0 %v981
        %1265 = vmatprep.subr.mxu0 0.0
        %1266 = vmatpush2.msra.mxu0 0.0
        %1267 = vmatprep.subr.mxu0 0.0
        %1268 = vmatpush2.msra.mxu0 0.0
        %1269 = vmatprep.subr.mxu0 0.0
        %1270 = vmatpush2.msra.mxu0 0.0
        %1271 = vmatprep.subr.mxu0 0.0
        %1272 = vmatpush2.msra.mxu0 0.0
        %1273 = vmatprep.subr.mxu0 0.0
        %1274 = vmatpush2.msra.mxu0 0.0
        %1275 = vmatprep.subr.mxu0 0.0
        %1276 = vmatpush2.msra.mxu0 0.0
        %1277 = vmatprep.subr.mxu0 0.0
        %1278 = vmatpush2.msra.mxu0 0.0
        %1279 = vmatprep.subr.mxu0 0.0
        %1280 = vmatpush2.msra.mxu0 0.0
        %1281 = vmatprep.subr.mxu0 0.0
        %1282 = vmatpush2.msra.mxu0 0.0
        %1283 = vmatprep.subr.mxu0 0.0
        %1284 = vmatpush2.msra.mxu0 0.0
        %1285 = vmatprep.subr.mxu0 0.0
        %1286 = vmatpush2.msra.mxu0 0.0
        %1287 = vmatprep.subr.mxu0 0.0
        %1288 = vmatpush2.msra.mxu0 0.0
        %1289 = vmatprep.subr.mxu0 0.0
        %1290 = vmatpush2.msra.mxu0 0.0
        %1291 = vmatprep.subr.mxu0 0.0
        %1292 = vmatpush2.msra.mxu0 0.0
        %1293 = vmatprep.subr.mxu0 0.0
        %1294 = vmatpush2.msra.mxu0 0.0
        %1295 = vmatprep.subr.mxu0 0.0
        %1296 = vmatpush2.msra.mxu0 0.0
        %1297 = vmatprep.mubr.f32.mxu0 0.0
        %1298 = vmatmul.mubr.f32.gmra.mxu0 %v1231
        %v1299 = vpop.f32.mrf.mxu0
        %v1300 = vadd.f32 %v1227, %v1299
        %v1301 = vpop.f32.mrf.mxu0
        %1302 = vdwg.mxu0
        %v1303 = vadd.f32 %v1300, %v579
        %v1304 = vsel %vm588, %v1303, 0.0
        %1305 = vadd.xlane.f32.xlu0 %v1304
        %v1306 = vpop.xlane.xlu0 %1305
        %v1307 = vrcp.pop 32.0
        %v1308 = vmul.f32 %v1306, %v1307
        %v1309 = vsub.f32 %v1303, %v1308
        %v1310 = vmul.f32 %v1309, %v1309
        %v1311 = vsel %vm588, %v1310, 0.0
        %1312 = vadd.xlane.f32.xlu0 %v1311
        %v1313 = vpop.xlane.xlu0 %1312
        %v1314 = vmul.f32 %v1313, %v1307
        %v1315 = vadd.f32 %v1314, 1e-06
        %v1316 = vrsqrt.pop %v1315
        %v1317 = vmul.f32 %v1309, %v1316
        %v1318 = vld [vmem:[%s8] sm:$0x1]
        %v1320 = vlaneseq
        %v1321 = vshrl.u32 %v1320, 7
        %v1322 = vsub.s32 0, %v1321
        %v1323 = vrot.slane %v1318, %v1322
        %v1325 = vmul.f32 %v1317, %v1323
        %v1326 = vld [vmem:[%s9] sm:$0x1]
        %v1328 = vlaneseq
        %v1329 = vshrl.u32 %v1328, 7
        %v1330 = vsub.s32 0, %v1329
        %v1331 = vrot.slane %v1326, %v1330
        %v1333 = vadd.f32 %v1325, %v1331
        %1334 = vst.msk [vmem:[%s568] sm:$0xff] %vm588, %v1333
        %s1335 = sand.u32 %s275, 1
        %s1336 = scalar_lea.sflag [#allocation4], %s1335
        %s1337 = sand.u32 %s275, 1
        %s1338 = smul.addr %s1337, 8
        %s1339 = scalar_lea.vmem [#allocation16], %s1338
        %p1340 = scmp.lt.s32.totalorder %s37, 1
        %s1341 = scalar_select %p1340, %s37, 1
        %s1342 = smul.addr %s1341, 8
        %s1343 = scalar_lea.vmem %s11, %s1342
        // Predicated region
        $region93: #{multi_head_attention.1} parent=59 // pred_check
          %p1344 = pneg %p285
        $region94: #{multi_head_attention.1} parent=59 // pred_check_branch
          %1346 = sbr.rel (%p1344) target = $region96
        $region95: #{multi_head_attention.1} parent=59 // pred_region
          %s1348 = ssub.s32 128, 128
          %1349 = vsyncadd %s1336, %s1348
          %s1350 = smul.addr %s37, 128
          %s1351 = scalar_lea.hbm %s10, %s1350
          %s1353 = sshll.u32 %s1339, 4
          %s1354 = int_to_ptr.vmem [resolvable:$true] %s1353
          %1356 = dma.vmem_to_hbm [thread:$0]  %s1354, 128, %s1351, %s1336
        $region96: #{multi_head_attention.1} parent=59 // pred_fallthru
          _
        // Predicated region
        $region97: #{multi_head_attention.1} parent=59 // pred_check
          %p1357 = pneg %p311
        $region98: #{multi_head_attention.1} parent=59 // pred_check_branch
          %1359 = sbr.rel (%p1357) target = $region100
        $region99: #{multi_head_attention.1} parent=59 // pred_region
          _
        $region100: #{multi_head_attention.1} parent=59 // pred_fallthru
          _
      $region60: #{multi_head_attention.1} parent=5 // pred_fallthru
        _
      %p1360 = scmp.le.s32.totalorder 2, %s32
      // Predicated region
      $region101: #{multi_head_attention.1} parent=5 // pred_check
        %p1361 = pneg %p1360
      $region102: #{multi_head_attention.1} parent=5 // pred_check_branch
        %1363 = sbr.rel (%p1361) target = $region104
      $region103: #{multi_head_attention.1} parent=5 // pred_region
        %s1364 = ssub.s32 %s32, 2
        // Predicated region
        $region105: #{multi_head_attention.1} parent=103 // pred_check
          %p1365 = pneg %p291
        $region106: #{multi_head_attention.1} parent=103 // pred_check_branch
          %1367 = sbr.rel (%p1365) target = $region108
        $region107: #{multi_head_attention.1} parent=103 // pred_region
          %s1368 = sand.u32 %s276, 1
          %s1369 = scalar_lea.sflag [#allocation4], %s1368
          %s1370 = sand.u32 %s276, 1
          %s1371 = smul.addr %s1370, 8
          %s1372 = scalar_lea.vmem [#allocation16], %s1371
          %1373 = dma.done %s1369, 128
        $region108: #{multi_head_attention.1} parent=103 // pred_fallthru
          _
        // Predicated region
        $region109: #{multi_head_attention.1} parent=103 // pred_check
          %p1374 = pneg %p317
        $region110: #{multi_head_attention.1} parent=103 // pred_check_branch
          %1376 = sbr.rel (%p1374) target = $region112
        $region111: #{multi_head_attention.1} parent=103 // pred_region
          %p1377 = scmp.lt.s32.totalorder %s38, 1
          %s1378 = scalar_select %p1377, %s38, 1
          %s1379 = smul.addr %s1378, 8
          %s1380 = scalar_lea.vmem %s11, %s1379
        $region112: #{multi_head_attention.1} parent=103 // pred_fallthru
          _
      $region104: #{multi_head_attention.1} parent=5 // pred_fallthru
        _
    $region6: #{multi_head_attention.1} parent=1 // loop_footer
      %s36 = sadd.s32 1, %s32
    $region7: #{multi_head_attention.1} parent=1 // loop_footer_branch
      %31 = sbr.rel target = $region3
    $region8: #{multi_head_attention.1} parent=1 // loop_exit
      _
    %1381 = vsyncpa [#allocation3], 1
    %s1382 = scalar_lea.sflag [#allocation3], 1
    %1383 = vsyncpa %s1382, 1
    %1384 = vsyncpa [#allocation6], 1
    %s1385 = scalar_lea.sflag [#allocation6], 1
    %1386 = vsyncpa %s1385, 1
    %1387 = vsyncpa [#allocation9], 1
    %s1388 = scalar_lea.sflag [#allocation9], 1
    %1389 = vsyncpa %s1388, 1
    %1390 = vsyncpa [#allocation12], 1
    %1391 = vsyncpa [#allocation15], 1
    %1392 = vsyncpa [#allocation4], 1
    %s1393 = scalar_lea.sflag [#allocation4], 1
    %1394 = vsyncpa %s1393, 1

</llo_original>
